<compile_context>
chip_gen: v7x
topology: tpu7x:2x2x1
jax: 0.10.0
libtpu: 0.0.40
codegen_flags: <defaults>
</compile_context>

<pallas_src>
import functools

import jax
import jax.numpy as jnp
import numpy as np
from jax.experimental import pallas as pl
from jax.experimental.pallas import tpu as pltpu


def _round_up(x, m):
    return ((x + m - 1) // m) * m


# ----------------------------- Pallas kernel --------------------------------
def actor_kernel(state_ref, w1_ref, w2_ref, w3_ref, wpi_ref, b_ref, segbd_ref,
                 mask_ref, out_ref, *, f1, f2, f3, out_lanes, b_off,
                 inv_n_edges):
    o1, o2, o3, o4 = b_off
    cdt = w1_ref.dtype            # matmul compute dtype (f32, or bf16 if enabled)

    def leaky(v):                 # leaky_relu(negative_slope=0.2)
        return jnp.maximum(v, 0.2 * v)

    x = state_ref[...].astype(cdt)
    h = leaky(jnp.dot(x, w1_ref[...], preferred_element_type=jnp.float32)
              + b_ref[:, o1:o1 + f1])
    h = leaky(jnp.dot(h.astype(cdt), w2_ref[...],
                      preferred_element_type=jnp.float32)
              + b_ref[:, o2:o2 + f2])
    h = leaky(jnp.dot(h.astype(cdt), w3_ref[...],
                      preferred_element_type=jnp.float32)
              + b_ref[:, o3:o3 + f3])
    logits = (jnp.dot(h.astype(cdt), wpi_ref[...],
                      preferred_element_type=jnp.float32)
              + b_ref[:, o4:o4 + out_lanes])            # [bt, out_lanes]

    # 128-lane-aligned static views of the fused mask slab (free slices).
    vmask = mask_ref[:, 0:out_lanes].astype(jnp.float32)
    fbflag = mask_ref[:, out_lanes:2 * out_lanes].astype(jnp.float32)
    gate = mask_ref[:, 2 * out_lanes:3 * out_lanes].astype(jnp.float32)

    # Masked softmax over each subtask's n_edges segment, fully vectorized.
    # A single row-wide max is mathematically equivalent to the reference's
    # per-segment max (softmax is shift invariant); only the edge lanes feed
    # it because vmask is zero everywhere else.
    # TODO(synk): switch to a per-segment max if trained logit spreads within
    # a row ever exceed ~80 (weak segments could underflow to zero otherwise).
    valid = vmask > 0
    masked = jnp.where(valid, logits, jnp.float32(-1e10))
    m_row = jnp.max(masked, axis=-1, keepdims=True)
    e = jnp.where(valid, jnp.exp(masked - m_row), 0.0)

    # Per-segment sums broadcast back to every lane via one resident
    # block-diagonal ones matrix (zero rows/cols outside the edge lanes, so
    # completion / pad lanes of `probs` are exactly 0).
    denom = jnp.dot(e, segbd_ref[...], preferred_element_type=jnp.float32)
    safe = jnp.maximum(denom, jnp.float32(1e-30))
    r = pl.reciprocal(safe, approx=True)                # EUP slot
    r = r * (2.0 - safe * r)                            # one Newton step
    probs = e * r

    # Branch-free assembly; the three terms occupy disjoint lanes.
    fallback = fbflag * jnp.float32(inv_n_edges)        # uniform for all-masked segments
    comp = jax.nn.sigmoid(logits) * gate                # completion lanes only
    out_ref[...] = probs + fallback + comp              # unmasked 128-lane store


# ------------------------------- wrapper -------------------------------------
def _tensorcores_per_chip():
    """Best-effort probe; single-TC inference chips get 1, everything else 2."""
    try:
        kind = jax.devices()[0].device_kind.lower()
    except Exception:
        return 1
    if any(tag in kind for tag in ("v2", "v3", "v5e", "v5 lite", "v6e", "v6 lite")):
        return 1
    return 2     # v4 / v5p megacore, v7x dual TensorCore, unknown future chips


def _pick_batch_tile(B, row_bytes, num_cores):
    """Largest divisor tile (<= byte/row cap) on single-TC chips; on multi-core
    chips keep the grid a multiple of num_cores (prefer >=2 steps per core)."""
    cap = min(2048, B, max(8, ((8 << 20) // max(row_bytes, 1)) // 8 * 8))
    cands = [t for t in range(1, cap + 1)
             if B % t == 0 and (t % 8 == 0 or t == B)]
    if not cands:
        return B
    if num_cores > 1:
        good = [t for t in cands if (B // t) % num_cores == 0]
        if good:
            pref = [t for t in good if t >= 256 and B // t >= 2 * num_cores]
            return max(pref) if pref else max(good)
    return max(cands)


def actor_forward(state, params, ready_mask, distance_mask, done_mask, off_mask,
                  *, n_subtasks, n_edges, batch_tile=None,
                  use_bf16_weights=False):
    """Pallas forward pass. distance_mask is [B, n_subtasks, n_edges]."""
    w1, b1, w2, b2, w3, b3, wpi, bpi = params
    B, d_in = state.shape
    f1, f2, f3 = w1.shape[1], w2.shape[1], w3.shape[1]
    total_actions = wpi.shape[1]
    edge_dim = n_subtasks * n_edges
    assert total_actions == edge_dim + n_subtasks

    out_lanes = _round_up(max(total_actions, 128), 128)

    # Lane-dense pi head: zero-pad to out_lanes columns.
    wpi_pad = jnp.pad(wpi, ((0, 0), (0, out_lanes - total_actions)))
    bpi_pad = jnp.pad(bpi, ((0, 0), (0, out_lanes - total_actions)))

    # Fuse all biases into one resident row (segments start on 128 multiples).
    p1, p2, p3 = _round_up(f1, 128), _round_up(f2, 128), _round_up(f3, 128)
    b_off = (0, p1, p1 + p2, p1 + p2 + p3)
    b_all = jnp.concatenate([
        jnp.pad(b1, ((0, 0), (0, p1 - f1))),
        jnp.pad(b2, ((0, 0), (0, p2 - f2))),
        jnp.pad(b3, ((0, 0), (0, p3 - f3))),
        bpi_pad,
    ], axis=-1)

    # Constant block-diagonal segment-sum matrix (trace-time numpy constant,
    # passed as one resident input).
    seg = np.zeros((out_lanes, out_lanes), np.float32)
    seg[:edge_dim, :edge_dim] = np.kron(
        np.eye(n_subtasks, dtype=np.float32),
        np.ones((n_edges, n_edges), np.float32))
    seg_bd = jnp.asarray(seg)

    # Fused mask slab: [validity | fully-masked flag | completion gate].
    # bf16 is exact for the {0,1} values stored here.
    valid_f = (distance_mask > 0).reshape(B, edge_dim).astype(jnp.float32)
    seg_any = jnp.any(distance_mask.reshape(B, n_subtasks, n_edges) > 0, axis=-1)
    fb_flag = jnp.repeat(jnp.logical_not(seg_any).astype(jnp.float32),
                         n_edges, axis=-1)
    gate = ready_mask * done_mask * off_mask
    pad_edge = out_lanes - edge_dim
    mask_all = jnp.concatenate([
        jnp.pad(valid_f, ((0, 0), (0, pad_edge))),
        jnp.pad(fb_flag, ((0, 0), (0, pad_edge))),
        jnp.pad(gate, ((0, 0), (edge_dim, out_lanes - total_actions))),
    ], axis=-1).astype(jnp.bfloat16)

    if use_bf16_weights:
        # v6e/v7x MXU fast path (breaks 1e-5 agreement with the f32 reference).
        w1, w2, w3, wpi_pad = (a.astype(jnp.bfloat16)
                               for a in (w1, w2, w3, wpi_pad))

    if batch_tile is None:
        row_bytes = (state.dtype.itemsize * d_in          # state
                     + 2 * 3 * out_lanes                  # bf16 mask slab
                     + 4 * out_lanes)                      # f32 output
        batch_tile = _pick_batch_tile(B, row_bytes, _tensorcores_per_chip())
    assert B % batch_tile == 0

    row_map = lambda i: (i, 0)
    rep_map = lambda i: (0, 0)    # constant block index -> resident, DMA'd once

    kernel = functools.partial(
        actor_kernel, f1=f1, f2=f2, f3=f3, out_lanes=out_lanes, b_off=b_off,
        inv_n_edges=1.0 / n_edges)

    fused = pl.pallas_call(
        kernel,
        out_shape=jax.ShapeDtypeStruct((B, out_lanes), jnp.float32),
        grid=(B // batch_tile,),
        in_specs=[
            pl.BlockSpec((batch_tile, d_in), row_map),           # state
            pl.BlockSpec((d_in, f1), rep_map),                   # w1
            pl.BlockSpec((f1, f2), rep_map),                     # w2
            pl.BlockSpec((f2, f3), rep_map),                     # w3
            pl.BlockSpec((f3, out_lanes), rep_map),              # wpi (padded)
            pl.BlockSpec((1, b_all.shape[1]), rep_map),          # fused biases
            pl.BlockSpec((out_lanes, out_lanes), rep_map),       # seg_bd
            pl.BlockSpec((batch_tile, 3 * out_lanes), row_map),  # mask slab
        ],
        out_specs=pl.BlockSpec((batch_tile, out_lanes), row_map),
        compiler_params=pltpu.CompilerParams(
            dimension_semantics=("parallel",)),
    )(state, w1, w2, w3, wpi_pad, b_all, seg_bd, mask_all)

    edge_probs = fused[:, :edge_dim].reshape(B, n_subtasks, n_edges)
    completion_rates = fused[:, edge_dim:total_actions]
    return edge_probs, completion_rates


# --------------------------- pure-JAX reference -------------------------------
def actor_reference(state, params, ready_mask, distance_mask, done_mask,
                    off_mask, *, n_subtasks, n_edges):
    w1, b1, w2, b2, w3, b3, wpi, bpi = params
    leaky = lambda v: jnp.where(v > 0, v, 0.2 * v)
    x = leaky(state @ w1 + b1)
    x = leaky(x @ w2 + b2)
    x = leaky(x @ w3 + b3)
    logits = x @ wpi + bpi
    edge_logits = logits[:, :n_subtasks * n_edges].reshape(-1, n_subtasks, n_edges)
    comp_logits = logits[:, n_subtasks * n_edges:]
    masked = jnp.where(distance_mask > 0, edge_logits, jnp.float32(-1e10))
    edge_probs = jax.nn.softmax(masked, axis=2)
    comp = jax.nn.sigmoid(comp_logits) * ready_mask * done_mask * off_mask
    return edge_probs, comp


# --------------------------------- main ---------------------------------------
if __name__ == "__main__":
    B = 256
    INPUT_DIMS = 32
    FC1 = FC2 = FC3 = 128
    N_SUBTASKS, N_EDGES = 4, 8
    TOTAL_ACTIONS = N_SUBTASKS * N_EDGES + N_SUBTASKS   # 36

    key = jax.random.PRNGKey(0)
    ks = jax.random.split(key, 16)

    def dense_init(kw, kb, fan_in, fan_out):
        lim = 1.0 / np.sqrt(fan_in)
        w = jax.random.uniform(kw, (fan_in, fan_out), jnp.float32, -lim, lim)
        b = jax.random.uniform(kb, (1, fan_out), jnp.float32, -lim, lim)
        return w, b

    w1, b1 = dense_init(ks[0], ks[1], INPUT_DIMS, FC1)
    w2, b2 = dense_init(ks[2], ks[3], FC1, FC2)
    w3, b3 = dense_init(ks[4], ks[5], FC2, FC3)
    wpi, bpi = dense_init(ks[6], ks[7], FC3, TOTAL_ACTIONS)
    params = (w1, b1, w2, b2, w3, b3, wpi, bpi)

    state = jax.random.normal(ks[8], (B, INPUT_DIMS), jnp.float32)
    ready_mask = jax.random.bernoulli(ks[9], 0.7, (B, N_SUBTASKS)).astype(jnp.float32)
    distance_mask = jax.random.bernoulli(ks[10], 0.6,
                                         (B, N_SUBTASKS, N_EDGES)).astype(jnp.float32)
    done_mask = jax.random.bernoulli(ks[11], 0.8, (B, N_SUBTASKS)).astype(jnp.float32)
    off_mask = jax.random.bernoulli(ks[12], 0.9, (B, N_SUBTASKS)).astype(jnp.float32)
    # Exercise the fully-masked-segment (uniform fallback) path explicitly.
    distance_mask = distance_mask.at[0, 0].set(0.0).at[1, 2].set(0.0)

    edge_probs, completion_rates = actor_forward(
        state, params, ready_mask, distance_mask, done_mask, off_mask,
        n_subtasks=N_SUBTASKS, n_edges=N_EDGES)
    jax.block_until_ready((edge_probs, completion_rates))

    ref_edge, ref_comp = actor_reference(
        state, params, ready_mask, distance_mask, done_mask, off_mask,
        n_subtasks=N_SUBTASKS, n_edges=N_EDGES)

    np.testing.assert_allclose(np.asarray(edge_probs), np.asarray(ref_edge),
                               rtol=1e-5, atol=1e-5)
    np.testing.assert_allclose(np.asarray(completion_rates), np.asarray(ref_comp),
                               rtol=1e-5, atol=1e-5)

    # TODO(synk): the Adam optimizer, checkpoint save/load and device placement
    # in the PyTorch module are training/IO concerns, not part of the forward
    # pass; not translated.
    print("KERNEL_OK")
</pallas_src>

<mosaic_0001>
module attributes {stable_mosaic.version = 11 : i64} {
  func.func @actor_kernel(%arg0: i32, %arg1: memref<128x32xf32, #tpu.memory_space<vmem>>, %arg2: memref<32x128xf32, #tpu.memory_space<vmem>>, %arg3: memref<128x128xf32, #tpu.memory_space<vmem>>, %arg4: memref<128x128xf32, #tpu.memory_space<vmem>>, %arg5: memref<128x128xf32, #tpu.memory_space<vmem>>, %arg6: memref<1x512xf32, #tpu.memory_space<vmem>>, %arg7: memref<128x128xf32, #tpu.memory_space<vmem>>, %arg8: memref<128x384xbf16, #tpu.memory_space<vmem>>, %arg9: memref<128x128xf32, #tpu.memory_space<vmem>>) attributes {dimension_semantics = [#tpu.dimension_semantics<parallel>], iteration_bounds = array<i64: 2>, scalar_prefetch = 0 : i64, scratch_operands = 0 : i64, tpu.core_type = #tpu.core_type<tc>, window_params = [{transform_indices = @transform_0, window_bounds = array<i64: 128, 32>}, {pipeline_mode = #tpu.pipeline_mode<synchronous>, transform_indices = @transform_1, window_bounds = array<i64: 32, 128>}, {pipeline_mode = #tpu.pipeline_mode<synchronous>, transform_indices = @transform_2, window_bounds = array<i64: 128, 128>}, {pipeline_mode = #tpu.pipeline_mode<synchronous>, transform_indices = @transform_3, window_bounds = array<i64: 128, 128>}, {pipeline_mode = #tpu.pipeline_mode<synchronous>, transform_indices = @transform_4, window_bounds = array<i64: 128, 128>}, {pipeline_mode = #tpu.pipeline_mode<synchronous>, transform_indices = @transform_5, window_bounds = array<i64: 1, 512>}, {pipeline_mode = #tpu.pipeline_mode<synchronous>, transform_indices = @transform_6, window_bounds = array<i64: 128, 128>}, {transform_indices = @transform_7, window_bounds = array<i64: 128, 384>}, {transform_indices = @transform_8, window_bounds = array<i64: 128, 128>}]} {
    %c0 = arith.constant 0 : index
    %c0_0 = arith.constant 0 : index
    %0 = vector.load %arg1[%c0, %c0_0] : memref<128x32xf32, #tpu.memory_space<vmem>>, vector<128x32xf32>
    %c0_1 = arith.constant 0 : index
    %c0_2 = arith.constant 0 : index
    %1 = vector.load %arg2[%c0_1, %c0_2] : memref<32x128xf32, #tpu.memory_space<vmem>>, vector<32x128xf32>
    %cst = arith.constant dense<0.000000e+00> : vector<128x128xf32>
    %2 = tpu.matmul %0, %1, %cst {dimension_numbers = #tpu.dot_dimension_numbers<[1], [0], [0], [1], [0, 0, 1, 1], [], []>} : vector<128x32xf32>, vector<32x128xf32>, vector<128x128xf32> -> vector<128x128xf32>
    %c0_3 = arith.constant 0 : index
    %c0_4 = arith.constant 0 : index
    %3 = vector.load %arg6[%c0_3, %c0_4] : memref<1x512xf32, #tpu.memory_space<vmem>>, vector<1x128xf32>
    %4 = vector.broadcast %3 : vector<1x128xf32> to vector<128x128xf32>
    %5 = arith.addf %2, %4 : vector<128x128xf32>
    %cst_5 = arith.constant 2.000000e-01 : f32
    %6 = vector.broadcast %cst_5 : f32 to vector<128x128xf32>
    %7 = arith.mulf %6, %5 : vector<128x128xf32>
    %8 = arith.maximumf %5, %7 : vector<128x128xf32>
    %c0_6 = arith.constant 0 : index
    %c0_7 = arith.constant 0 : index
    %9 = vector.load %arg3[%c0_6, %c0_7] : memref<128x128xf32, #tpu.memory_space<vmem>>, vector<128x128xf32>
    %cst_8 = arith.constant dense<0.000000e+00> : vector<128x128xf32>
    %10 = tpu.matmul %8, %9, %cst_8 {dimension_numbers = #tpu.dot_dimension_numbers<[1], [0], [0], [1], [0, 0, 1, 1], [], []>} : vector<128x128xf32>, vector<128x128xf32>, vector<128x128xf32> -> vector<128x128xf32>
    %c0_9 = arith.constant 0 : index
    %c128 = arith.constant 128 : index
    %11 = vector.load %arg6[%c0_9, %c128] : memref<1x512xf32, #tpu.memory_space<vmem>>, vector<1x128xf32>
    %12 = vector.broadcast %11 : vector<1x128xf32> to vector<128x128xf32>
    %13 = arith.addf %10, %12 : vector<128x128xf32>
    %cst_10 = arith.constant 2.000000e-01 : f32
    %14 = vector.broadcast %cst_10 : f32 to vector<128x128xf32>
    %15 = arith.mulf %14, %13 : vector<128x128xf32>
    %16 = arith.maximumf %13, %15 : vector<128x128xf32>
    %c0_11 = arith.constant 0 : index
    %c0_12 = arith.constant 0 : index
    %17 = vector.load %arg4[%c0_11, %c0_12] : memref<128x128xf32, #tpu.memory_space<vmem>>, vector<128x128xf32>
    %cst_13 = arith.constant dense<0.000000e+00> : vector<128x128xf32>
    %18 = tpu.matmul %16, %17, %cst_13 {dimension_numbers = #tpu.dot_dimension_numbers<[1], [0], [0], [1], [0, 0, 1, 1], [], []>} : vector<128x128xf32>, vector<128x128xf32>, vector<128x128xf32> -> vector<128x128xf32>
    %c0_14 = arith.constant 0 : index
    %c256 = arith.constant 256 : index
    %19 = vector.load %arg6[%c0_14, %c256] : memref<1x512xf32, #tpu.memory_space<vmem>>, vector<1x128xf32>
    %20 = vector.broadcast %19 : vector<1x128xf32> to vector<128x128xf32>
    %21 = arith.addf %18, %20 : vector<128x128xf32>
    %cst_15 = arith.constant 2.000000e-01 : f32
    %22 = vector.broadcast %cst_15 : f32 to vector<128x128xf32>
    %23 = arith.mulf %22, %21 : vector<128x128xf32>
    %24 = arith.maximumf %21, %23 : vector<128x128xf32>
    %c0_16 = arith.constant 0 : index
    %c0_17 = arith.constant 0 : index
    %25 = vector.load %arg5[%c0_16, %c0_17] : memref<128x128xf32, #tpu.memory_space<vmem>>, vector<128x128xf32>
    %cst_18 = arith.constant dense<0.000000e+00> : vector<128x128xf32>
    %26 = tpu.matmul %24, %25, %cst_18 {dimension_numbers = #tpu.dot_dimension_numbers<[1], [0], [0], [1], [0, 0, 1, 1], [], []>} : vector<128x128xf32>, vector<128x128xf32>, vector<128x128xf32> -> vector<128x128xf32>
    %c0_19 = arith.constant 0 : index
    %c384 = arith.constant 384 : index
    %27 = vector.load %arg6[%c0_19, %c384] : memref<1x512xf32, #tpu.memory_space<vmem>>, vector<1x128xf32>
    %28 = vector.broadcast %27 : vector<1x128xf32> to vector<128x128xf32>
    %29 = arith.addf %26, %28 : vector<128x128xf32>
    %c0_20 = arith.constant 0 : index
    %c0_21 = arith.constant 0 : index
    %30 = vector.load %arg8[%c0_20, %c0_21] : memref<128x384xbf16, #tpu.memory_space<vmem>>, vector<128x128xbf16>
    %31 = arith.extf %30 : vector<128x128xbf16> to vector<128x128xf32>
    %c0_22 = arith.constant 0 : index
    %c128_23 = arith.constant 128 : index
    %32 = vector.load %arg8[%c0_22, %c128_23] : memref<128x384xbf16, #tpu.memory_space<vmem>>, vector<128x128xbf16>
    %33 = arith.extf %32 : vector<128x128xbf16> to vector<128x128xf32>
    %c0_24 = arith.constant 0 : index
    %c256_25 = arith.constant 256 : index
    %34 = vector.load %arg8[%c0_24, %c256_25] : memref<128x384xbf16, #tpu.memory_space<vmem>>, vector<128x128xbf16>
    %35 = arith.extf %34 : vector<128x128xbf16> to vector<128x128xf32>
    %cst_26 = arith.constant 0.000000e+00 : f32
    %36 = vector.broadcast %cst_26 : f32 to vector<128x128xf32>
    %37 = arith.cmpf ogt, %31, %36 : vector<128x128xf32>
    %cst_27 = arith.constant -1.000000e+10 : f32
    %38 = vector.broadcast %cst_27 : f32 to vector<128x128xf32>
    %39 = arith.select %37, %29, %38 : vector<128x128xi1>, vector<128x128xf32>
    %cst_28 = arith.constant dense<0xFF800000> : vector<128xf32>
    %40 = vector.multi_reduction <maximumf>, %39, %cst_28 [1] : vector<128x128xf32> to vector<128xf32>
    %41 = vector.shape_cast %40 : vector<128xf32> to vector<128x1xf32>
    %42 = vector.broadcast %41 : vector<128x1xf32> to vector<128x128xf32>
    %43 = arith.subf %39, %42 : vector<128x128xf32>
    %44 = math.exp %43 : vector<128x128xf32>
    %cst_29 = arith.constant 0.000000e+00 : f32
    %45 = vector.broadcast %cst_29 : f32 to vector<128x128xf32>
    %46 = arith.select %37, %44, %45 : vector<128x128xi1>, vector<128x128xf32>
    %c0_30 = arith.constant 0 : index
    %c0_31 = arith.constant 0 : index
    %47 = vector.load %arg7[%c0_30, %c0_31] : memref<128x128xf32, #tpu.memory_space<vmem>>, vector<128x128xf32>
    %cst_32 = arith.constant dense<0.000000e+00> : vector<128x128xf32>
    %48 = tpu.matmul %46, %47, %cst_32 {dimension_numbers = #tpu.dot_dimension_numbers<[1], [0], [0], [1], [0, 0, 1, 1], [], []>} : vector<128x128xf32>, vector<128x128xf32>, vector<128x128xf32> -> vector<128x128xf32>
    %cst_33 = arith.constant 1.000000e-30 : f32
    %49 = vector.broadcast %cst_33 : f32 to vector<128x128xf32>
    %50 = arith.maximumf %48, %49 : vector<128x128xf32>
    %51 = tpu.reciprocal %50 {approx = true} : vector<128x128xf32> -> vector<128x128xf32>
    %52 = arith.mulf %50, %51 : vector<128x128xf32>
    %cst_34 = arith.constant 2.000000e+00 : f32
    %53 = vector.broadcast %cst_34 : f32 to vector<128x128xf32>
    %54 = arith.subf %53, %52 : vector<128x128xf32>
    %55 = arith.mulf %51, %54 : vector<128x128xf32>
    %56 = arith.mulf %46, %55 : vector<128x128xf32>
    %cst_35 = arith.constant 1.250000e-01 : f32
    %57 = vector.broadcast %cst_35 : f32 to vector<128x128xf32>
    %58 = arith.mulf %33, %57 : vector<128x128xf32>
    %59 = arith.negf %29 : vector<128x128xf32>
    %60 = math.exp %59 : vector<128x128xf32>
    %cst_36 = arith.constant 1.000000e+00 : f32
    %61 = vector.broadcast %cst_36 : f32 to vector<128x128xf32>
    %62 = arith.addf %61, %60 : vector<128x128xf32>
    %63 = arith.divf %61, %62 : vector<128x128xf32>
    %64 = arith.mulf %63, %35 : vector<128x128xf32>
    %65 = arith.addf %56, %58 : vector<128x128xf32>
    %66 = arith.addf %65, %64 : vector<128x128xf32>
    %c0_37 = arith.constant 0 : index
    %c0_38 = arith.constant 0 : index
    %67 = vector.load %arg9[%c0_37, %c0_38] : memref<128x128xf32, #tpu.memory_space<vmem>>, vector<128x128xf32>
    tpu.vector_store %arg9[%c0_37, %c0_38], %66 {strides = array<i32>} : memref<128x128xf32, #tpu.memory_space<vmem>>, vector<128x128xf32>,
    return
  }
  func.func @transform_0(%arg0: i32) -> (i32, i32) {
    %c0_i32 = arith.constant 0 : i32
    %c0_i32_0 = arith.constant 0 : i32
    return %arg0, %c0_i32 : i32, i32
  }
  func.func @transform_1(%arg0: i32) -> (i32, i32) {
    %c0_i32 = arith.constant 0 : i32
    %c0_i32_0 = arith.constant 0 : i32
    %c0_i32_1 = arith.constant 0 : i32
    return %c0_i32, %c0_i32_0 : i32, i32
  }
  func.func @transform_2(%arg0: i32) -> (i32, i32) {
    %c0_i32 = arith.constant 0 : i32
    %c0_i32_0 = arith.constant 0 : i32
    %c0_i32_1 = arith.constant 0 : i32
    return %c0_i32, %c0_i32_0 : i32, i32
  }
  func.func @transform_3(%arg0: i32) -> (i32, i32) {
    %c0_i32 = arith.constant 0 : i32
    %c0_i32_0 = arith.constant 0 : i32
    %c0_i32_1 = arith.constant 0 : i32
    return %c0_i32, %c0_i32_0 : i32, i32
  }
  func.func @transform_4(%arg0: i32) -> (i32, i32) {
    %c0_i32 = arith.constant 0 : i32
    %c0_i32_0 = arith.constant 0 : i32
    %c0_i32_1 = arith.constant 0 : i32
    return %c0_i32, %c0_i32_0 : i32, i32
  }
  func.func @transform_5(%arg0: i32) -> (i32, i32) {
    %c0_i32 = arith.constant 0 : i32
    %c0_i32_0 = arith.constant 0 : i32
    %c0_i32_1 = arith.constant 0 : i32
    return %c0_i32, %c0_i32_0 : i32, i32
  }
  func.func @transform_6(%arg0: i32) -> (i32, i32) {
    %c0_i32 = arith.constant 0 : i32
    %c0_i32_0 = arith.constant 0 : i32
    %c0_i32_1 = arith.constant 0 : i32
    return %c0_i32, %c0_i32_0 : i32, i32
  }
  func.func @transform_7(%arg0: i32) -> (i32, i32) {
    %c0_i32 = arith.constant 0 : i32
    %c0_i32_0 = arith.constant 0 : i32
    return %arg0, %c0_i32 : i32, i32
  }
  func.func @transform_8(%arg0: i32) -> (i32, i32) {
    %c0_i32 = arith.constant 0 : i32
    %c0_i32_0 = arith.constant 0 : i32
    return %arg0, %c0_i32 : i32, i32
  }
}

</mosaic_0001>

<llo_original>
// kernel: tpu_custom_call.1
$region0: #{tpu_custom_call.1}
  #allocation0 [shape = 'u32[]', space=smem, size = 0x4, offset = 0x4, fixed_abs, tag = 'smem constant byte address 0x4 - core index']
  #allocation1 [shape = 'u32[144,128]{1,0:T(1,128)}', space=vmem, size = 0x12000, scoped, tag = 'internal scratch']
  %s0 = inlined_call_operand.vmem [shape: f32[256,32], index: 0, kind: input, shape index: {}]
  %s1 = inlined_call_operand.vmem [shape: f32[32,128], index: 1, kind: input, shape index: {}]
  %s2 = inlined_call_operand.vmem [shape: f32[128,128], index: 2, kind: input, shape index: {}]
  %s3 = inlined_call_operand.vmem [shape: f32[128,128], index: 3, kind: input, shape index: {}]
  %s4 = inlined_call_operand.hbm [shape: f32[128,128], index: 4, kind: input, shape index: {}]
  %s5 = inlined_call_operand.vmem [shape: f32[1,512], index: 5, kind: input, shape index: {}]
  %s6 = inlined_call_operand.hbm [shape: f32[128,128], index: 6, kind: input, shape index: {}]
  %s7 = inlined_call_operand.hbm [shape: bf16[256,384], index: 7, kind: input, shape index: {}]
  %s8 = inlined_call_operand.hbm [shape: f32[256,128], index: 8, kind: output, shape index: {}]
  %s9 = sld [smem:[#allocation0]]
  $region77: #{tpu_custom_call.1} parent=0
    _
  %s11 = ssub.s32 1, %s9
  %s12 = scalar_select 0, %s11, %s9
  $region1: #{tpu_custom_call.1} parent=0
    #allocation2 [shape = 'u8[65536]{0}', space=vmem, size = 0x10000, scoped, tag = 'input window, operand 4, single buffered']
    #allocation3 [shape = 's32[2]{0}', space=sflag, size = 0x8, scoped, tag = 'scoped memory for tpu_custom_call.1']
    #allocation4 [shape = 's32[2]{0}', space=sflag, size = 0x8, scoped, tag = 'scoped memory for tpu_custom_call.1']
    #allocation5 [shape = 'u8[65536]{0}', space=vmem, size = 0x10000, scoped, tag = 'input window, operand 6, single buffered']
    #allocation6 [shape = 's32[1]{0}', space=sflag, size = 0x4, scoped, tag = 'scoped memory for tpu_custom_call.1']
    #allocation7 [shape = 'u8[196608]{0}', space=vmem, size = 0x30000, scoped, tag = 'input window, operand 7']
    #allocation8 [shape = 'u8[131072]{0}', space=vmem, size = 0x20000, scoped, tag = 'output window, operand 0']
    %13 = vsyncpa [#allocation3], 0
    %14 = vsyncpa [#allocation6], 0
    %15 = vsyncpa [#allocation4], 0
    %s16 = scalar_lea.sflag [#allocation4], 1
    %17 = vsyncpa %s16, 0
    loop: start=0, step=1, limit=4
    $region2: #{tpu_custom_call.1} parent=1 // loop_pre_header
      _
    $region3: #{tpu_custom_call.1} parent=1 // loop_header
      %s19 = sphi 0, %s23
      %p20 = scmp.ge.s32.totalorder %s19, 4
      %s29 = sphi 0, %s31
      %s32 = sphi 0, %s29
      %s33 = sphi 0, %s32
      %s49 = sphi 0, %s33
      %s53 = sphi 0, %s53
      %s55 = sphi 0, %s53
      %s56 = sphi 0, %s55
      %s70 = sphi 0, %s56
      %s74 = sphi 0, %s74
      %s76 = sphi 0, %s74
      %s77 = sphi 0, %s76
      %s91 = sphi 0, %s77
      %s95 = sphi 0, %s95
      %s97 = sphi 0, %s95
      %s98 = sphi 0, %s97
      %s112 = sphi 0, %s98
      %s116 = sphi 0, %s116
      %s118 = sphi 0, %s116
      %s119 = sphi 0, %s118
      %s133 = sphi 0, %s119
      %s137 = sphi 0, %s137
      %s139 = sphi 0, %s137
      %s140 = sphi 0, %s139
      %s154 = sphi 0, %s140
      %s158 = sphi 0, %s158
      %s160 = sphi 0, %s158
      %s161 = sphi 0, %s160
      %s175 = sphi 0, %s161
      %s181 = sphi 0, %s183
      %s184 = sphi 0, %s181
      %s185 = sphi 0, %s184
      %s201 = sphi 0, %s185
      %s207 = sphi 0, %s209
      %s210 = sphi 0, %s207
      %s211 = sphi 0, %s210
      %s227 = sphi 0, %s211
    $region4: #{tpu_custom_call.1} parent=1 // loop_header_branch
      %22 = sbr.rel (%p20) target = $region8
    $region5: #{tpu_custom_call.1} parent=1 // loop_body
      %s24 = ssub.s32 %s19, 1
      %s25 = ssub.s32 %s19, 2
      %s26 = sadd.s32 %s19, 1
      %s27 = ssub.s32 %s19, %s26
      %p28 = scmp.eq.s32.totalorder %s27, 0
      %s30 = sadd.s32 %s29, 1
      %s31 = scalar_select %p28, %s29, %s30
      %p34 = pneg %p28
      %p35 = scmp.eq.s32.totalorder %s19, 1
      %p36 = por %p34, %p35
      %p37 = scmp.ne.s32.totalorder %s29, %s32
      %p38 = scmp.eq.s32.totalorder %s19, 0
      %p39 = por %p37, %p38
      %p40 = scmp.ne.s32.totalorder %s29, %s32
      %p41 = scmp.eq.s32.totalorder %s24, 1
      %p42 = por %p40, %p41
      %p43 = scmp.ne.s32.totalorder %s32, %s33
      %p44 = scmp.eq.s32.totalorder %s24, 0
      %p45 = por %p43, %p44
      %p46 = scmp.ne.s32.totalorder %s32, %s33
      %p47 = scmp.eq.s32.totalorder %s25, 1
      %p48 = por %p46, %p47
      %p50 = scmp.ne.s32.totalorder %s33, %s49
      %p51 = scmp.eq.s32.totalorder %s25, 0
      %p52 = por %p50, %p51
      %s54 = sadd.s32 %s53, 1
      %p57 = scmp.eq.s32.totalorder %s19, 1
      %p58 = scmp.ne.s32.totalorder %s53, %s55
      %p59 = scmp.eq.s32.totalorder %s19, 0
      %p60 = por %p58, %p59
      %p61 = scmp.ne.s32.totalorder %s53, %s55
      %p62 = scmp.eq.s32.totalorder %s24, 1
      %p63 = por %p61, %p62
      %p64 = scmp.ne.s32.totalorder %s55, %s56
      %p65 = scmp.eq.s32.totalorder %s24, 0
      %p66 = por %p64, %p65
      %p67 = scmp.ne.s32.totalorder %s55, %s56
      %p68 = scmp.eq.s32.totalorder %s25, 1
      %p69 = por %p67, %p68
      %p71 = scmp.ne.s32.totalorder %s56, %s70
      %p72 = scmp.eq.s32.totalorder %s25, 0
      %p73 = por %p71, %p72
      %s75 = sadd.s32 %s74, 1
      %p78 = scmp.eq.s32.totalorder %s19, 1
      %p79 = scmp.ne.s32.totalorder %s74, %s76
      %p80 = scmp.eq.s32.totalorder %s19, 0
      %p81 = por %p79, %p80
      %p82 = scmp.ne.s32.totalorder %s74, %s76
      %p83 = scmp.eq.s32.totalorder %s24, 1
      %p84 = por %p82, %p83
      %p85 = scmp.ne.s32.totalorder %s76, %s77
      %p86 = scmp.eq.s32.totalorder %s24, 0
      %p87 = por %p85, %p86
      %p88 = scmp.ne.s32.totalorder %s76, %s77
      %p89 = scmp.eq.s32.totalorder %s25, 1
      %p90 = por %p88, %p89
      %p92 = scmp.ne.s32.totalorder %s77, %s91
      %p93 = scmp.eq.s32.totalorder %s25, 0
      %p94 = por %p92, %p93
      %s96 = sadd.s32 %s95, 1
      %p99 = scmp.eq.s32.totalorder %s19, 1
      %p100 = scmp.ne.s32.totalorder %s95, %s97
      %p101 = scmp.eq.s32.totalorder %s19, 0
      %p102 = por %p100, %p101
      %p103 = scmp.ne.s32.totalorder %s95, %s97
      %p104 = scmp.eq.s32.totalorder %s24, 1
      %p105 = por %p103, %p104
      %p106 = scmp.ne.s32.totalorder %s97, %s98
      %p107 = scmp.eq.s32.totalorder %s24, 0
      %p108 = por %p106, %p107
      %p109 = scmp.ne.s32.totalorder %s97, %s98
      %p110 = scmp.eq.s32.totalorder %s25, 1
      %p111 = por %p109, %p110
      %p113 = scmp.ne.s32.totalorder %s98, %s112
      %p114 = scmp.eq.s32.totalorder %s25, 0
      %p115 = por %p113, %p114
      %s117 = sadd.s32 %s116, 1
      %p120 = scmp.eq.s32.totalorder %s19, 1
      %p121 = scmp.ne.s32.totalorder %s116, %s118
      %p122 = scmp.eq.s32.totalorder %s19, 0
      %p123 = por %p121, %p122
      %p124 = scmp.ne.s32.totalorder %s116, %s118
      %p125 = scmp.eq.s32.totalorder %s24, 1
      %p126 = por %p124, %p125
      %p127 = scmp.ne.s32.totalorder %s118, %s119
      %p128 = scmp.eq.s32.totalorder %s24, 0
      %p129 = por %p127, %p128
      %p130 = scmp.ne.s32.totalorder %s118, %s119
      %p131 = scmp.eq.s32.totalorder %s25, 1
      %p132 = por %p130, %p131
      %p134 = scmp.ne.s32.totalorder %s119, %s133
      %p135 = scmp.eq.s32.totalorder %s25, 0
      %p136 = por %p134, %p135
      %s138 = sadd.s32 %s137, 1
      %p141 = scmp.eq.s32.totalorder %s19, 1
      %p142 = scmp.ne.s32.totalorder %s137, %s139
      %p143 = scmp.eq.s32.totalorder %s19, 0
      %p144 = por %p142, %p143
      %p145 = scmp.ne.s32.totalorder %s137, %s139
      %p146 = scmp.eq.s32.totalorder %s24, 1
      %p147 = por %p145, %p146
      %p148 = scmp.ne.s32.totalorder %s139, %s140
      %p149 = scmp.eq.s32.totalorder %s24, 0
      %p150 = por %p148, %p149
      %p151 = scmp.ne.s32.totalorder %s139, %s140
      %p152 = scmp.eq.s32.totalorder %s25, 1
      %p153 = por %p151, %p152
      %p155 = scmp.ne.s32.totalorder %s140, %s154
      %p156 = scmp.eq.s32.totalorder %s25, 0
      %p157 = por %p155, %p156
      %s159 = sadd.s32 %s158, 1
      %p162 = scmp.eq.s32.totalorder %s19, 1
      %p163 = scmp.ne.s32.totalorder %s158, %s160
      %p164 = scmp.eq.s32.totalorder %s19, 0
      %p165 = por %p163, %p164
      %p166 = scmp.ne.s32.totalorder %s158, %s160
      %p167 = scmp.eq.s32.totalorder %s24, 1
      %p168 = por %p166, %p167
      %p169 = scmp.ne.s32.totalorder %s160, %s161
      %p170 = scmp.eq.s32.totalorder %s24, 0
      %p171 = por %p169, %p170
      %p172 = scmp.ne.s32.totalorder %s160, %s161
      %p173 = scmp.eq.s32.totalorder %s25, 1
      %p174 = por %p172, %p173
      %p176 = scmp.ne.s32.totalorder %s161, %s175
      %p177 = scmp.eq.s32.totalorder %s25, 0
      %p178 = por %p176, %p177
      %s179 = ssub.s32 %s19, %s26
      %p180 = scmp.eq.s32.totalorder %s179, 0
      %s182 = sadd.s32 %s181, 1
      %s183 = scalar_select %p180, %s181, %s182
      %p186 = pneg %p180
      %p187 = scmp.eq.s32.totalorder %s19, 1
      %p188 = por %p186, %p187
      %p189 = scmp.ne.s32.totalorder %s181, %s184
      %p190 = scmp.eq.s32.totalorder %s19, 0
      %p191 = por %p189, %p190
      %p192 = scmp.ne.s32.totalorder %s181, %s184
      %p193 = scmp.eq.s32.totalorder %s24, 1
      %p194 = por %p192, %p193
      %p195 = scmp.ne.s32.totalorder %s184, %s185
      %p196 = scmp.eq.s32.totalorder %s24, 0
      %p197 = por %p195, %p196
      %p198 = scmp.ne.s32.totalorder %s184, %s185
      %p199 = scmp.eq.s32.totalorder %s25, 1
      %p200 = por %p198, %p199
      %p202 = scmp.ne.s32.totalorder %s185, %s201
      %p203 = scmp.eq.s32.totalorder %s25, 0
      %p204 = por %p202, %p203
      %s205 = ssub.s32 %s19, %s26
      %p206 = scmp.eq.s32.totalorder %s205, 0
      %s208 = sadd.s32 %s207, 1
      %s209 = scalar_select %p206, %s207, %s208
      %p212 = pneg %p206
      %p213 = scmp.eq.s32.totalorder %s19, 1
      %p214 = por %p212, %p213
      %p215 = scmp.ne.s32.totalorder %s207, %s210
      %p216 = scmp.eq.s32.totalorder %s19, 0
      %p217 = por %p215, %p216
      %p218 = scmp.ne.s32.totalorder %s207, %s210
      %p219 = scmp.eq.s32.totalorder %s24, 1
      %p220 = por %p218, %p219
      %p221 = scmp.ne.s32.totalorder %s210, %s211
      %p222 = scmp.eq.s32.totalorder %s24, 0
      %p223 = por %p221, %p222
      %p224 = scmp.ne.s32.totalorder %s210, %s211
      %p225 = scmp.eq.s32.totalorder %s25, 1
      %p226 = por %p224, %p225
      %p228 = scmp.ne.s32.totalorder %s211, %s227
      %p229 = scmp.eq.s32.totalorder %s25, 0
      %p230 = por %p228, %p229
      %p231 = scmp.le.s32.totalorder 1, %s19
      %p232 = scmp.lt.s32.totalorder %s19, 3
      %p233 = pnand %p231, %p232
      %p234 = pneg %p233
      // Predicated region
      $region9: #{tpu_custom_call.1} parent=5 // pred_check
        _
      $region10: #{tpu_custom_call.1} parent=5 // pred_check_branch
        %236 = sbr.rel (%p233) target = $region12
      $region11: #{tpu_custom_call.1} parent=5 // pred_region
        %s237 = ssub.s32 %s19, 1
        // Predicated region
        $region13: #{tpu_custom_call.1} parent=11 // pred_check
          %p238 = pneg %p66
        $region14: #{tpu_custom_call.1} parent=11 // pred_check_branch
          %240 = sbr.rel (%p238) target = $region16
        $region15: #{tpu_custom_call.1} parent=11 // pred_region
          _
        $region16: #{tpu_custom_call.1} parent=11 // pred_fallthru
          _
        // Predicated region
        $region17: #{tpu_custom_call.1} parent=11 // pred_check
          %p241 = pneg %p87
        $region18: #{tpu_custom_call.1} parent=11 // pred_check_branch
          %243 = sbr.rel (%p241) target = $region20
        $region19: #{tpu_custom_call.1} parent=11 // pred_region
          _
        $region20: #{tpu_custom_call.1} parent=11 // pred_fallthru
          _
        // Predicated region
        $region21: #{tpu_custom_call.1} parent=11 // pred_check
          %p244 = pneg %p108
        $region22: #{tpu_custom_call.1} parent=11 // pred_check_branch
          %246 = sbr.rel (%p244) target = $region24
        $region23: #{tpu_custom_call.1} parent=11 // pred_region
          _
        $region24: #{tpu_custom_call.1} parent=11 // pred_fallthru
          _
        // Predicated region
        $region25: #{tpu_custom_call.1} parent=11 // pred_check
          %p247 = pneg %p129
        $region26: #{tpu_custom_call.1} parent=11 // pred_check_branch
          %249 = sbr.rel (%p247) target = $region28
        $region27: #{tpu_custom_call.1} parent=11 // pred_region
          %s251 = ssub.s32 2048, 2048
          %252 = vsyncadd [#allocation3], %s251
          %s253 = sshll.u32 [#allocation2], 4
          %s254 = int_to_ptr.vmem [resolvable:$true] %s253
          %259 = dma.hbm_to_vmem [thread:$0]  %s4, 2048, %s254, [#allocation3], 128, 128, 8
        $region28: #{tpu_custom_call.1} parent=11 // pred_fallthru
          _
        // Predicated region
        $region29: #{tpu_custom_call.1} parent=11 // pred_check
          %p260 = pneg %p150
        $region30: #{tpu_custom_call.1} parent=11 // pred_check_branch
          %262 = sbr.rel (%p260) target = $region32
        $region31: #{tpu_custom_call.1} parent=11 // pred_region
          _
        $region32: #{tpu_custom_call.1} parent=11 // pred_fallthru
          _
        // Predicated region
        $region33: #{tpu_custom_call.1} parent=11 // pred_check
          %p263 = pneg %p171
        $region34: #{tpu_custom_call.1} parent=11 // pred_check_branch
          %265 = sbr.rel (%p263) target = $region36
        $region35: #{tpu_custom_call.1} parent=11 // pred_region
          %s267 = ssub.s32 2048, 2048
          %268 = vsyncadd [#allocation6], %s267
          %s269 = sshll.u32 [#allocation5], 4
          %s270 = int_to_ptr.vmem [resolvable:$true] %s269
          %275 = dma.hbm_to_vmem [thread:$0]  %s6, 2048, %s270, [#allocation6], 128, 128, 8
        $region36: #{tpu_custom_call.1} parent=11 // pred_fallthru
          _
      $region12: #{tpu_custom_call.1} parent=5 // pred_fallthru
        _
      %p276 = scmp.lt.s32.totalorder %s19, 2
      // Predicated region
      $region37: #{tpu_custom_call.1} parent=5 // pred_check
        %p277 = pneg %p276
      $region38: #{tpu_custom_call.1} parent=5 // pred_check_branch
        %279 = sbr.rel (%p277) target = $region40
      $region39: #{tpu_custom_call.1} parent=5 // pred_region
        // Predicated region
        $region41: #{tpu_custom_call.1} parent=39 // pred_check
          %p280 = pneg %p39
        $region42: #{tpu_custom_call.1} parent=39 // pred_check_branch
          %282 = sbr.rel (%p280) target = $region44
        $region43: #{tpu_custom_call.1} parent=39 // pred_region
          %s283 = smul.u32 16, %s19
          %p284 = scmp.lt.s32.totalorder %s283, 31
          %s285 = scalar_select %p284, %s283, 31
          %s286 = smul.addr %s285, 8
          %s287 = scalar_lea.vmem %s0, %s286
          %s288 = smul.u32 16, %s19
        $region44: #{tpu_custom_call.1} parent=39 // pred_fallthru
          _
        // Predicated region
        $region45: #{tpu_custom_call.1} parent=39 // pred_check
          %p289 = pneg %p191
        $region46: #{tpu_custom_call.1} parent=39 // pred_check_branch
          %291 = sbr.rel (%p289) target = $region48
        $region47: #{tpu_custom_call.1} parent=39 // pred_region
          %s292 = sand.u32 %s19, 1
          %s293 = scalar_lea.sflag [#allocation3], %s292
          %s294 = sand.u32 %s181, 1
          %s295 = smul.addr %s294, 192
          %s296 = scalar_lea.vmem [#allocation7], %s295
          %s297 = smul.u32 16, %s19
          %s299 = ssub.s32 3072, 3072
          %300 = vsyncadd %s293, %s299
          %s301 = smul.addr %s297, 3
          %s302 = smul.addr %s301, 64
          %s303 = scalar_lea.hbm %s7, %s302
          %s304 = sshll.u32 %s296, 4
          %s305 = int_to_ptr.vmem [resolvable:$true] %s304
          %310 = dma.hbm_to_vmem [thread:$0]  %s303, 3072, %s305, %s293, 192, 192, 12
        $region48: #{tpu_custom_call.1} parent=39 // pred_fallthru
          _
      $region40: #{tpu_custom_call.1} parent=5 // pred_fallthru
        _
      %p311 = scmp.le.s32.totalorder 1, %s19
      %p312 = scmp.lt.s32.totalorder %s19, 3
      %p313 = pnand %p311, %p312
      %p314 = pneg %p313
      // Predicated region
      $region49: #{tpu_custom_call.1} parent=5 // pred_check
        _
      $region50: #{tpu_custom_call.1} parent=5 // pred_check_branch
        %316 = sbr.rel (%p313) target = $region52
      $region51: #{tpu_custom_call.1} parent=5 // pred_region
        %s317 = ssub.s32 %s19, 1
        // Predicated region
        $region53: #{tpu_custom_call.1} parent=51 // pred_check
          %p318 = pneg %p129
        $region54: #{tpu_custom_call.1} parent=51 // pred_check_branch
          %320 = sbr.rel (%p318) target = $region56
        $region55: #{tpu_custom_call.1} parent=51 // pred_region
          %321 = dma.done [#allocation3], 2048
        $region56: #{tpu_custom_call.1} parent=51 // pred_fallthru
          _
        // Predicated region
        $region57: #{tpu_custom_call.1} parent=51 // pred_check
          %p322 = pneg %p171
        $region58: #{tpu_custom_call.1} parent=51 // pred_check_branch
          %324 = sbr.rel (%p322) target = $region60
        $region59: #{tpu_custom_call.1} parent=51 // pred_region
          %325 = dma.done [#allocation6], 2048
        $region60: #{tpu_custom_call.1} parent=51 // pred_fallthru
          _
        %s326 = sand.u32 %s24, 1
        %s327 = scalar_lea.sflag [#allocation3], %s326
        %s328 = sand.u32 %s184, 1
        %s329 = smul.addr %s328, 192
        %s330 = scalar_lea.vmem [#allocation7], %s329
        // Predicated region
        $region61: #{tpu_custom_call.1} parent=51 // pred_check
          %p331 = pneg %p197
        $region62: #{tpu_custom_call.1} parent=51 // pred_check_branch
          %333 = sbr.rel (%p331) target = $region64
        $region63: #{tpu_custom_call.1} parent=51 // pred_region
          %334 = dma.done %s327, 3072
        $region64: #{tpu_custom_call.1} parent=51 // pred_fallthru
          _
        %s335 = smul.u32 16, %s24
        %p336 = scmp.lt.s32.totalorder %s335, 31
        %s337 = scalar_select %p336, %s335, 31
        %s338 = smul.addr %s337, 8
        %s339 = scalar_lea.vmem %s0, %s338
        %p340 = pneg %p45
        %p341 = pneg %p42
        %p342 = pneg %p66
        %p343 = pneg %p63
        %p344 = pneg %p87
        %p345 = pneg %p84
        %p346 = pneg %p108
        %p347 = pneg %p105
        %p348 = pneg %p129
        %p349 = pneg %p126
        %p350 = pneg %p150
        %p351 = pneg %p147
        %p352 = pneg %p171
        %p353 = pneg %p168
        %s354 = sand.u32 %s24, 1
        %s355 = scalar_lea.sflag [#allocation3], %s354
        %s356 = sand.u32 %s184, 1
        %s357 = smul.addr %s356, 192
        %s358 = scalar_lea.vmem [#allocation7], %s357
        %p359 = pneg %p197
        %p360 = pneg %p194
        %p361 = pneg %p223
        %p362 = pneg %p220
        %s363 = sand.u32 %s210, 1
        %s364 = scalar_lea.sflag [#allocation4], %s363
        %s365 = sand.u32 %s210, 1
        %s366 = smul.addr %s365, 128
        %s367 = scalar_lea.vmem [#allocation8], %s366
        %s368 = smul.u32 16, %s24
        %p369 = scmp.lt.s32.totalorder %s368, 31
        %s370 = scalar_select %p369, %s368, 31
        %s371 = smul.addr %s370, 8
        %s372 = scalar_lea.vmem %s0, %s371
        %s373 = smul.u32 16, %s24
        %s374 = smul.u32 16, %s24
        %s375 = smul.u32 16, %s24
        %v376 = vld [vmem:[%s372] sm:$0xff]
        %v377 = vld [vmem:[%s372 + $0x8] sm:$0xff]
        %v378 = vld [vmem:[%s372 + $0x10] sm:$0xff]
        %v379 = vld [vmem:[%s372 + $0x18] sm:$0xff]
        %v380 = vld [vmem:[%s372 + $0x20] sm:$0xff]
        %v381 = vld [vmem:[%s372 + $0x28] sm:$0xff]
        %v382 = vld [vmem:[%s372 + $0x30] sm:$0xff]
        %v383 = vld [vmem:[%s372 + $0x38] sm:$0xff]
        %v384 = vld [vmem:[%s372 + $0x40] sm:$0xff]
        %v385 = vld [vmem:[%s372 + $0x48] sm:$0xff]
        %v386 = vld [vmem:[%s372 + $0x50] sm:$0xff]
        %v387 = vld [vmem:[%s372 + $0x58] sm:$0xff]
        %v388 = vld [vmem:[%s372 + $0x60] sm:$0xff]
        %v389 = vld [vmem:[%s372 + $0x68] sm:$0xff]
        %v390 = vld [vmem:[%s372 + $0x70] sm:$0xff]
        %v391 = vld [vmem:[%s372 + $0x78] sm:$0xff]
        %v392 = vld [vmem:[%s1] sm:$0xff]
        %v393 = vld [vmem:[%s1 + $0x8] sm:$0xff]
        %v394 = vld [vmem:[%s1 + $0x10] sm:$0xff]
        %v395 = vld [vmem:[%s1 + $0x18] sm:$0xff]
        %v396 = vld [vmem:[%s5] sm:$0x1]
        %v398 = vlaneseq
        %v399 = vshrl.u32 %v398, 7
        %v400 = vsub.s32 0, %v399
        %v401 = vrot.slane %v396, %v400
        %vm403 = vcmask 261120
        %v405 = vsel %vm403, %v376, 0
        %v408 = vsel %vm403, %v377, 0
        %v411 = vsel %vm403, %v378, 0
        %v414 = vsel %vm403, %v379, 0
        %v417 = vsel %vm403, %v380, 0
        %v420 = vsel %vm403, %v381, 0
        %v423 = vsel %vm403, %v382, 0
        %v426 = vsel %vm403, %v383, 0
        %v429 = vsel %vm403, %v384, 0
        %v432 = vsel %vm403, %v385, 0
        %v435 = vsel %vm403, %v386, 0
        %v438 = vsel %vm403, %v387, 0
        %v441 = vsel %vm403, %v388, 0
        %v444 = vsel %vm403, %v389, 0
        %v447 = vsel %vm403, %v390, 0
        %v450 = vsel %vm403, %v391, 0
        %452 = vmatprep.subr.mxu0 0.0
        %453 = vmatpush1.msra.mxu0 %v392
        %454 = vmatprep.subr.mxu0 0.0
        %455 = vmatpush1.msra.mxu0 %v393
        %456 = vmatprep.subr.mxu0 0.0
        %457 = vmatpush1.msra.mxu0 %v394
        %458 = vmatprep.subr.mxu0 0.0
        %459 = vmatpush1.msra.mxu0 %v395
        %460 = vmatprep.subr.mxu0 0.0
        %461 = vmatpush1.msra.mxu0 0.0
        %462 = vmatprep.subr.mxu0 0.0
        %463 = vmatpush1.msra.mxu0 0.0
        %464 = vmatprep.subr.mxu0 0.0
        %465 = vmatpush1.msra.mxu0 0.0
        %466 = vmatprep.subr.mxu0 0.0
        %467 = vmatpush1.msra.mxu0 0.0
        %468 = vmatprep.subr.mxu0 0.0
        %469 = vmatpush1.msra.mxu0 0.0
        %470 = vmatprep.subr.mxu0 0.0
        %471 = vmatpush1.msra.mxu0 0.0
        %472 = vmatprep.subr.mxu0 0.0
        %473 = vmatpush1.msra.mxu0 0.0
        %474 = vmatprep.subr.mxu0 0.0
        %475 = vmatpush1.msra.mxu0 0.0
        %476 = vmatprep.subr.mxu0 0.0
        %477 = vmatpush1.msra.mxu0 0.0
        %478 = vmatprep.subr.mxu0 0.0
        %479 = vmatpush1.msra.mxu0 0.0
        %480 = vmatprep.subr.mxu0 0.0
        %481 = vmatpush1.msra.mxu0 0.0
        %482 = vmatprep.subr.mxu0 0.0
        %483 = vmatpush1.msra.mxu0 0.0
        %484 = vmatprep.subr.mxu0 0.0
        %485 = vmatpush1.msra.mxu0 0.0
        %486 = vmatprep.subr.mxu0 0.0
        %487 = vmatpush1.msra.mxu0 0.0
        %488 = vmatprep.subr.mxu0 0.0
        %489 = vmatpush1.msra.mxu0 0.0
        %490 = vmatprep.subr.mxu0 0.0
        %491 = vmatpush1.msra.mxu0 0.0
        %492 = vmatprep.subr.mxu0 0.0
        %493 = vmatpush1.msra.mxu0 0.0
        %494 = vmatprep.subr.mxu0 0.0
        %495 = vmatpush1.msra.mxu0 0.0
        %496 = vmatprep.subr.mxu0 0.0
        %497 = vmatpush1.msra.mxu0 0.0
        %498 = vmatprep.subr.mxu0 0.0
        %499 = vmatpush1.msra.mxu0 0.0
        %500 = vmatprep.subr.mxu0 0.0
        %501 = vmatpush1.msra.mxu0 0.0
        %502 = vmatprep.subr.mxu0 0.0
        %503 = vmatpush1.msra.mxu0 0.0
        %504 = vmatprep.subr.mxu0 0.0
        %505 = vmatpush1.msra.mxu0 0.0
        %506 = vmatprep.subr.mxu0 0.0
        %507 = vmatpush1.msra.mxu0 0.0
        %508 = vmatprep.subr.mxu0 0.0
        %509 = vmatpush1.msra.mxu0 0.0
        %510 = vmatprep.subr.mxu0 0.0
        %511 = vmatpush1.msra.mxu0 0.0
        %512 = vmatprep.subr.mxu0 0.0
        %513 = vmatpush1.msra.mxu0 0.0
        %514 = vmatprep.subr.mxu0 0.0
        %515 = vmatpush1.msra.mxu0 0.0
        %516 = vmatprep.mubr.f32.mxu0 0.0
        %517 = vmatmul.mubr.f32.gmra.mrb[0].mxu0 %v405
        %v518 = vpop.f32.mrb[0].mxu0
        %v519 = vadd.f32 %v401, %v518
        %v520 = vpop.f32.mrb[0].mxu0
        %521 = vmatprep.mubr.f32.mxu0 0.0
        %522 = vmatmul.mubr.f32.gmra.mrb[0].mxu0 %v408
        %v523 = vpop.f32.mrb[0].mxu0
        %v524 = vadd.f32 %v401, %v523
        %v525 = vpop.f32.mrb[0].mxu0
        %526 = vmatprep.mubr.f32.mxu0 0.0
        %527 = vmatmul.mubr.f32.gmra.mrb[0].mxu0 %v411
        %v528 = vpop.f32.mrb[0].mxu0
        %v529 = vadd.f32 %v401, %v528
        %v530 = vpop.f32.mrb[0].mxu0
        %531 = vmatprep.mubr.f32.mxu0 0.0
        %532 = vmatmul.mubr.f32.gmra.mrb[0].mxu0 %v414
        %v533 = vpop.f32.mrb[0].mxu0
        %v534 = vadd.f32 %v401, %v533
        %v535 = vpop.f32.mrb[0].mxu0
        %536 = vmatprep.mubr.f32.mxu0 0.0
        %537 = vmatmul.mubr.f32.gmra.mrb[0].mxu0 %v417
        %v538 = vpop.f32.mrb[0].mxu0
        %v539 = vadd.f32 %v401, %v538
        %v540 = vpop.f32.mrb[0].mxu0
        %541 = vmatprep.mubr.f32.mxu0 0.0
        %542 = vmatmul.mubr.f32.gmra.mrb[0].mxu0 %v420
        %v543 = vpop.f32.mrb[0].mxu0
        %v544 = vadd.f32 %v401, %v543
        %v545 = vpop.f32.mrb[0].mxu0
        %546 = vmatprep.mubr.f32.mxu0 0.0
        %547 = vmatmul.mubr.f32.gmra.mrb[0].mxu0 %v423
        %v548 = vpop.f32.mrb[0].mxu0
        %v549 = vadd.f32 %v401, %v548
        %v550 = vpop.f32.mrb[0].mxu0
        %551 = vmatprep.mubr.f32.mxu0 0.0
        %552 = vmatmul.mubr.f32.gmra.mrb[0].mxu0 %v426
        %v553 = vpop.f32.mrb[0].mxu0
        %v554 = vadd.f32 %v401, %v553
        %v555 = vpop.f32.mrb[0].mxu0
        %556 = vmatprep.mubr.f32.mxu0 0.0
        %557 = vmatmul.mubr.f32.gmra.mrb[0].mxu0 %v429
        %v558 = vpop.f32.mrb[0].mxu0
        %v559 = vadd.f32 %v401, %v558
        %v560 = vpop.f32.mrb[0].mxu0
        %561 = vmatprep.mubr.f32.mxu0 0.0
        %562 = vmatmul.mubr.f32.gmra.mrb[0].mxu0 %v432
        %v563 = vpop.f32.mrb[0].mxu0
        %v564 = vadd.f32 %v401, %v563
        %v565 = vpop.f32.mrb[0].mxu0
        %566 = vmatprep.mubr.f32.mxu0 0.0
        %567 = vmatmul.mubr.f32.gmra.mrb[0].mxu0 %v435
        %v568 = vpop.f32.mrb[0].mxu0
        %v569 = vadd.f32 %v401, %v568
        %v570 = vpop.f32.mrb[0].mxu0
        %571 = vmatprep.mubr.f32.mxu0 0.0
        %572 = vmatmul.mubr.f32.gmra.mrb[0].mxu0 %v438
        %v573 = vpop.f32.mrb[0].mxu0
        %v574 = vadd.f32 %v401, %v573
        %v575 = vpop.f32.mrb[0].mxu0
        %576 = vmatprep.mubr.f32.mxu0 0.0
        %577 = vmatmul.mubr.f32.gmra.mrb[0].mxu0 %v441
        %v578 = vpop.f32.mrb[0].mxu0
        %v579 = vadd.f32 %v401, %v578
        %v580 = vpop.f32.mrb[0].mxu0
        %581 = vmatprep.mubr.f32.mxu0 0.0
        %582 = vmatmul.mubr.f32.gmra.mrb[0].mxu0 %v444
        %v583 = vpop.f32.mrb[0].mxu0
        %v584 = vadd.f32 %v401, %v583
        %v585 = vpop.f32.mrb[0].mxu0
        %586 = vmatprep.mubr.f32.mxu0 0.0
        %587 = vmatmul.mubr.f32.gmra.mrb[0].mxu0 %v447
        %v588 = vpop.f32.mrb[0].mxu0
        %v589 = vadd.f32 %v401, %v588
        %v590 = vpop.f32.mrb[0].mxu0
        %591 = vmatprep.mubr.f32.mxu0 0.0
        %592 = vmatmul.mubr.f32.gmra.mrb[0].mxu0 %v450
        %v593 = vpop.f32.mrb[0].mxu0
        %v594 = vadd.f32 %v401, %v593
        %v595 = vpop.f32.mrb[0].mxu0
        %596 = vdwg.mxu0
        %v597 = vmul.f32 %v519, 0.2
        %v598 = vmul.f32 %v524, 0.2
        %v599 = vmul.f32 %v529, 0.2
        %v600 = vmul.f32 %v534, 0.2
        %v601 = vmul.f32 %v539, 0.2
        %v602 = vmul.f32 %v544, 0.2
        %v603 = vmul.f32 %v549, 0.2
        %v604 = vmul.f32 %v554, 0.2
        %v605 = vmul.f32 %v559, 0.2
        %v606 = vmul.f32 %v564, 0.2
        %v607 = vmul.f32 %v569, 0.2
        %v608 = vmul.f32 %v574, 0.2
        %v609 = vmul.f32 %v579, 0.2
        %v610 = vmul.f32 %v584, 0.2
        %v611 = vmul.f32 %v589, 0.2
        %v612 = vmul.f32 %v594, 0.2
        %v613 = vmax.f32 %v519, %v597
        %v614 = vmax.f32 %v524, %v598
        %v615 = vmax.f32 %v529, %v599
        %v616 = vmax.f32 %v534, %v600
        %v617 = vmax.f32 %v539, %v601
        %v618 = vmax.f32 %v544, %v602
        %v619 = vmax.f32 %v549, %v603
        %v620 = vmax.f32 %v554, %v604
        %v621 = vmax.f32 %v559, %v605
        %v622 = vmax.f32 %v564, %v606
        %v623 = vmax.f32 %v569, %v607
        %v624 = vmax.f32 %v574, %v608
        %v625 = vmax.f32 %v579, %v609
        %v626 = vmax.f32 %v584, %v610
        %v627 = vmax.f32 %v589, %v611
        %v628 = vmax.f32 %v594, %v612
        %v629 = vld [vmem:[%s2] sm:$0xff]
        %v630 = vld [vmem:[%s2 + $0x8] sm:$0xff]
        %v631 = vld [vmem:[%s2 + $0x10] sm:$0xff]
        %v632 = vld [vmem:[%s2 + $0x18] sm:$0xff]
        %v633 = vld [vmem:[%s2 + $0x20] sm:$0xff]
        %v634 = vld [vmem:[%s2 + $0x28] sm:$0xff]
        %v635 = vld [vmem:[%s2 + $0x30] sm:$0xff]
        %v636 = vld [vmem:[%s2 + $0x38] sm:$0xff]
        %v637 = vld [vmem:[%s2 + $0x40] sm:$0xff]
        %v638 = vld [vmem:[%s2 + $0x48] sm:$0xff]
        %v639 = vld [vmem:[%s2 + $0x50] sm:$0xff]
        %v640 = vld [vmem:[%s2 + $0x58] sm:$0xff]
        %v641 = vld [vmem:[%s2 + $0x60] sm:$0xff]
        %v642 = vld [vmem:[%s2 + $0x68] sm:$0xff]
        %v643 = vld [vmem:[%s2 + $0x70] sm:$0xff]
        %v644 = vld [vmem:[%s2 + $0x78] sm:$0xff]
        %v645 = vld [vmem:[%s5 + $0x1] sm:$0x1]
        %v647 = vlaneseq
        %v648 = vshrl.u32 %v647, 7
        %v649 = vsub.s32 0, %v648
        %v650 = vrot.slane %v645, %v649
        %652 = vmatprep.subr.mxu0 0.0
        %653 = vmatpush1.msra.mxu0 %v629
        %654 = vmatprep.subr.mxu0 0.0
        %655 = vmatpush1.msra.mxu0 %v630
        %656 = vmatprep.subr.mxu0 0.0
        %657 = vmatpush1.msra.mxu0 %v631
        %658 = vmatprep.subr.mxu0 0.0
        %659 = vmatpush1.msra.mxu0 %v632
        %660 = vmatprep.subr.mxu0 0.0
        %661 = vmatpush1.msra.mxu0 %v633
        %662 = vmatprep.subr.mxu0 0.0
        %663 = vmatpush1.msra.mxu0 %v634
        %664 = vmatprep.subr.mxu0 0.0
        %665 = vmatpush1.msra.mxu0 %v635
        %666 = vmatprep.subr.mxu0 0.0
        %667 = vmatpush1.msra.mxu0 %v636
        %668 = vmatprep.subr.mxu0 0.0
        %669 = vmatpush1.msra.mxu0 %v637
        %670 = vmatprep.subr.mxu0 0.0
        %671 = vmatpush1.msra.mxu0 %v638
        %672 = vmatprep.subr.mxu0 0.0
        %673 = vmatpush1.msra.mxu0 %v639
        %674 = vmatprep.subr.mxu0 0.0
        %675 = vmatpush1.msra.mxu0 %v640
        %676 = vmatprep.subr.mxu0 0.0
        %677 = vmatpush1.msra.mxu0 %v641
        %678 = vmatprep.subr.mxu0 0.0
        %679 = vmatpush1.msra.mxu0 %v642
        %680 = vmatprep.subr.mxu0 0.0
        %681 = vmatpush1.msra.mxu0 %v643
        %682 = vmatprep.subr.mxu0 0.0
        %683 = vmatpush1.msra.mxu0 %v644
        %684 = vmatprep.subr.mxu0 0.0
        %685 = vmatpush1.msra.mxu0 0.0
        %686 = vmatprep.subr.mxu0 0.0
        %687 = vmatpush1.msra.mxu0 0.0
        %688 = vmatprep.subr.mxu0 0.0
        %689 = vmatpush1.msra.mxu0 0.0
        %690 = vmatprep.subr.mxu0 0.0
        %691 = vmatpush1.msra.mxu0 0.0
        %692 = vmatprep.subr.mxu0 0.0
        %693 = vmatpush1.msra.mxu0 0.0
        %694 = vmatprep.subr.mxu0 0.0
        %695 = vmatpush1.msra.mxu0 0.0
        %696 = vmatprep.subr.mxu0 0.0
        %697 = vmatpush1.msra.mxu0 0.0
        %698 = vmatprep.subr.mxu0 0.0
        %699 = vmatpush1.msra.mxu0 0.0
        %700 = vmatprep.subr.mxu0 0.0
        %701 = vmatpush1.msra.mxu0 0.0
        %702 = vmatprep.subr.mxu0 0.0
        %703 = vmatpush1.msra.mxu0 0.0
        %704 = vmatprep.subr.mxu0 0.0
        %705 = vmatpush1.msra.mxu0 0.0
        %706 = vmatprep.subr.mxu0 0.0
        %707 = vmatpush1.msra.mxu0 0.0
        %708 = vmatprep.subr.mxu0 0.0
        %709 = vmatpush1.msra.mxu0 0.0
        %710 = vmatprep.subr.mxu0 0.0
        %711 = vmatpush1.msra.mxu0 0.0
        %712 = vmatprep.subr.mxu0 0.0
        %713 = vmatpush1.msra.mxu0 0.0
        %714 = vmatprep.subr.mxu0 0.0
        %715 = vmatpush1.msra.mxu0 0.0
        %716 = vmatprep.mubr.f32.mxu0 0.0
        %717 = vmatmul.mubr.f32.gmra.mrb[0].mxu0 %v613
        %v718 = vpop.f32.mrb[0].mxu0
        %v719 = vadd.f32 %v650, %v718
        %v720 = vpop.f32.mrb[0].mxu0
        %721 = vmatprep.mubr.f32.mxu0 0.0
        %722 = vmatmul.mubr.f32.gmra.mrb[0].mxu0 %v614
        %v723 = vpop.f32.mrb[0].mxu0
        %v724 = vadd.f32 %v650, %v723
        %v725 = vpop.f32.mrb[0].mxu0
        %726 = vmatprep.mubr.f32.mxu0 0.0
        %727 = vmatmul.mubr.f32.gmra.mrb[0].mxu0 %v615
        %v728 = vpop.f32.mrb[0].mxu0
        %v729 = vadd.f32 %v650, %v728
        %v730 = vpop.f32.mrb[0].mxu0
        %731 = vmatprep.mubr.f32.mxu0 0.0
        %732 = vmatmul.mubr.f32.gmra.mrb[0].mxu0 %v616
        %v733 = vpop.f32.mrb[0].mxu0
        %v734 = vadd.f32 %v650, %v733
        %v735 = vpop.f32.mrb[0].mxu0
        %736 = vmatprep.mubr.f32.mxu0 0.0
        %737 = vmatmul.mubr.f32.gmra.mrb[0].mxu0 %v617
        %v738 = vpop.f32.mrb[0].mxu0
        %v739 = vadd.f32 %v650, %v738
        %v740 = vpop.f32.mrb[0].mxu0
        %741 = vmatprep.mubr.f32.mxu0 0.0
        %742 = vmatmul.mubr.f32.gmra.mrb[0].mxu0 %v618
        %v743 = vpop.f32.mrb[0].mxu0
        %v744 = vadd.f32 %v650, %v743
        %v745 = vpop.f32.mrb[0].mxu0
        %746 = vmatprep.mubr.f32.mxu0 0.0
        %747 = vmatmul.mubr.f32.gmra.mrb[0].mxu0 %v619
        %v748 = vpop.f32.mrb[0].mxu0
        %v749 = vadd.f32 %v650, %v748
        %v750 = vpop.f32.mrb[0].mxu0
        %751 = vmatprep.mubr.f32.mxu0 0.0
        %752 = vmatmul.mubr.f32.gmra.mrb[0].mxu0 %v620
        %v753 = vpop.f32.mrb[0].mxu0
        %v754 = vadd.f32 %v650, %v753
        %v755 = vpop.f32.mrb[0].mxu0
        %756 = vmatprep.mubr.f32.mxu0 0.0
        %757 = vmatmul.mubr.f32.gmra.mrb[0].mxu0 %v621
        %v758 = vpop.f32.mrb[0].mxu0
        %v759 = vadd.f32 %v650, %v758
        %v760 = vpop.f32.mrb[0].mxu0
        %761 = vmatprep.mubr.f32.mxu0 0.0
        %762 = vmatmul.mubr.f32.gmra.mrb[0].mxu0 %v622
        %v763 = vpop.f32.mrb[0].mxu0
        %v764 = vadd.f32 %v650, %v763
        %v765 = vpop.f32.mrb[0].mxu0
        %766 = vmatprep.mubr.f32.mxu0 0.0
        %767 = vmatmul.mubr.f32.gmra.mrb[0].mxu0 %v623
        %v768 = vpop.f32.mrb[0].mxu0
        %v769 = vadd.f32 %v650, %v768
        %v770 = vpop.f32.mrb[0].mxu0
        %771 = vmatprep.mubr.f32.mxu0 0.0
        %772 = vmatmul.mubr.f32.gmra.mrb[0].mxu0 %v624
        %v773 = vpop.f32.mrb[0].mxu0
        %v774 = vadd.f32 %v650, %v773
        %v775 = vpop.f32.mrb[0].mxu0
        %776 = vmatprep.mubr.f32.mxu0 0.0
        %777 = vmatmul.mubr.f32.gmra.mrb[0].mxu0 %v625
        %v778 = vpop.f32.mrb[0].mxu0
        %v779 = vadd.f32 %v650, %v778
        %v780 = vpop.f32.mrb[0].mxu0
        %781 = vmatprep.mubr.f32.mxu0 0.0
        %782 = vmatmul.mubr.f32.gmra.mrb[0].mxu0 %v626
        %v783 = vpop.f32.mrb[0].mxu0
        %v784 = vadd.f32 %v650, %v783
        %v785 = vpop.f32.mrb[0].mxu0
        %786 = vmatprep.mubr.f32.mxu0 0.0
        %787 = vmatmul.mubr.f32.gmra.mrb[0].mxu0 %v627
        %v788 = vpop.f32.mrb[0].mxu0
        %v789 = vadd.f32 %v650, %v788
        %v790 = vpop.f32.mrb[0].mxu0
        %791 = vmatprep.mubr.f32.mxu0 0.0
        %792 = vmatmul.mubr.f32.gmra.mrb[0].mxu0 %v628
        %v793 = vpop.f32.mrb[0].mxu0
        %v794 = vadd.f32 %v650, %v793
        %v795 = vpop.f32.mrb[0].mxu0
        %796 = vdwg.mxu0
        %v797 = vmul.f32 %v719, 0.2
        %v798 = vmul.f32 %v724, 0.2
        %v799 = vmul.f32 %v729, 0.2
        %v800 = vmul.f32 %v734, 0.2
        %v801 = vmul.f32 %v739, 0.2
        %v802 = vmul.f32 %v744, 0.2
        %v803 = vmul.f32 %v749, 0.2
        %v804 = vmul.f32 %v754, 0.2
        %v805 = vmul.f32 %v759, 0.2
        %v806 = vmul.f32 %v764, 0.2
        %v807 = vmul.f32 %v769, 0.2
        %v808 = vmul.f32 %v774, 0.2
        %v809 = vmul.f32 %v779, 0.2
        %v810 = vmul.f32 %v784, 0.2
        %v811 = vmul.f32 %v789, 0.2
        %v812 = vmul.f32 %v794, 0.2
        %v813 = vmax.f32 %v719, %v797
        %v814 = vmax.f32 %v724, %v798
        %v815 = vmax.f32 %v729, %v799
        %v816 = vmax.f32 %v734, %v800
        %v817 = vmax.f32 %v739, %v801
        %v818 = vmax.f32 %v744, %v802
        %v819 = vmax.f32 %v749, %v803
        %v820 = vmax.f32 %v754, %v804
        %v821 = vmax.f32 %v759, %v805
        %v822 = vmax.f32 %v764, %v806
        %v823 = vmax.f32 %v769, %v807
        %v824 = vmax.f32 %v774, %v808
        %v825 = vmax.f32 %v779, %v809
        %v826 = vmax.f32 %v784, %v810
        %v827 = vmax.f32 %v789, %v811
        %v828 = vmax.f32 %v794, %v812
        %v829 = vld [vmem:[%s3] sm:$0xff]
        %v830 = vld [vmem:[%s3 + $0x8] sm:$0xff]
        %v831 = vld [vmem:[%s3 + $0x10] sm:$0xff]
        %v832 = vld [vmem:[%s3 + $0x18] sm:$0xff]
        %v833 = vld [vmem:[%s3 + $0x20] sm:$0xff]
        %v834 = vld [vmem:[%s3 + $0x28] sm:$0xff]
        %v835 = vld [vmem:[%s3 + $0x30] sm:$0xff]
        %v836 = vld [vmem:[%s3 + $0x38] sm:$0xff]
        %v837 = vld [vmem:[%s3 + $0x40] sm:$0xff]
        %v838 = vld [vmem:[%s3 + $0x48] sm:$0xff]
        %v839 = vld [vmem:[%s3 + $0x50] sm:$0xff]
        %v840 = vld [vmem:[%s3 + $0x58] sm:$0xff]
        %v841 = vld [vmem:[%s3 + $0x60] sm:$0xff]
        %v842 = vld [vmem:[%s3 + $0x68] sm:$0xff]
        %v843 = vld [vmem:[%s3 + $0x70] sm:$0xff]
        %v844 = vld [vmem:[%s3 + $0x78] sm:$0xff]
        %v845 = vld [vmem:[%s5 + $0x2] sm:$0x1]
        %v847 = vlaneseq
        %v848 = vshrl.u32 %v847, 7
        %v849 = vsub.s32 0, %v848
        %v850 = vrot.slane %v845, %v849
        %852 = vmatprep.subr.mxu0 0.0
        %853 = vmatpush1.msra.mxu0 %v829
        %854 = vmatprep.subr.mxu0 0.0
        %855 = vmatpush1.msra.mxu0 %v830
        %856 = vmatprep.subr.mxu0 0.0
        %857 = vmatpush1.msra.mxu0 %v831
        %858 = vmatprep.subr.mxu0 0.0
        %859 = vmatpush1.msra.mxu0 %v832
        %860 = vmatprep.subr.mxu0 0.0
        %861 = vmatpush1.msra.mxu0 %v833
        %862 = vmatprep.subr.mxu0 0.0
        %863 = vmatpush1.msra.mxu0 %v834
        %864 = vmatprep.subr.mxu0 0.0
        %865 = vmatpush1.msra.mxu0 %v835
        %866 = vmatprep.subr.mxu0 0.0
        %867 = vmatpush1.msra.mxu0 %v836
        %868 = vmatprep.subr.mxu0 0.0
        %869 = vmatpush1.msra.mxu0 %v837
        %870 = vmatprep.subr.mxu0 0.0
        %871 = vmatpush1.msra.mxu0 %v838
        %872 = vmatprep.subr.mxu0 0.0
        %873 = vmatpush1.msra.mxu0 %v839
        %874 = vmatprep.subr.mxu0 0.0
        %875 = vmatpush1.msra.mxu0 %v840
        %876 = vmatprep.subr.mxu0 0.0
        %877 = vmatpush1.msra.mxu0 %v841
        %878 = vmatprep.subr.mxu0 0.0
        %879 = vmatpush1.msra.mxu0 %v842
        %880 = vmatprep.subr.mxu0 0.0
        %881 = vmatpush1.msra.mxu0 %v843
        %882 = vmatprep.subr.mxu0 0.0
        %883 = vmatpush1.msra.mxu0 %v844
        %884 = vmatprep.subr.mxu0 0.0
        %885 = vmatpush1.msra.mxu0 0.0
        %886 = vmatprep.subr.mxu0 0.0
        %887 = vmatpush1.msra.mxu0 0.0
        %888 = vmatprep.subr.mxu0 0.0
        %889 = vmatpush1.msra.mxu0 0.0
        %890 = vmatprep.subr.mxu0 0.0
        %891 = vmatpush1.msra.mxu0 0.0
        %892 = vmatprep.subr.mxu0 0.0
        %893 = vmatpush1.msra.mxu0 0.0
        %894 = vmatprep.subr.mxu0 0.0
        %895 = vmatpush1.msra.mxu0 0.0
        %896 = vmatprep.subr.mxu0 0.0
        %897 = vmatpush1.msra.mxu0 0.0
        %898 = vmatprep.subr.mxu0 0.0
        %899 = vmatpush1.msra.mxu0 0.0
        %900 = vmatprep.subr.mxu0 0.0
        %901 = vmatpush1.msra.mxu0 0.0
        %902 = vmatprep.subr.mxu0 0.0
        %903 = vmatpush1.msra.mxu0 0.0
        %904 = vmatprep.subr.mxu0 0.0
        %905 = vmatpush1.msra.mxu0 0.0
        %906 = vmatprep.subr.mxu0 0.0
        %907 = vmatpush1.msra.mxu0 0.0
        %908 = vmatprep.subr.mxu0 0.0
        %909 = vmatpush1.msra.mxu0 0.0
        %910 = vmatprep.subr.mxu0 0.0
        %911 = vmatpush1.msra.mxu0 0.0
        %912 = vmatprep.subr.mxu0 0.0
        %913 = vmatpush1.msra.mxu0 0.0
        %914 = vmatprep.subr.mxu0 0.0
        %915 = vmatpush1.msra.mxu0 0.0
        %916 = vmatprep.mubr.f32.mxu0 0.0
        %917 = vmatmul.mubr.f32.gmra.mrb[0].mxu0 %v813
        %v918 = vpop.f32.mrb[0].mxu0
        %v919 = vadd.f32 %v850, %v918
        %v920 = vpop.f32.mrb[0].mxu0
        %921 = vmatprep.mubr.f32.mxu0 0.0
        %922 = vmatmul.mubr.f32.gmra.mrb[0].mxu0 %v814
        %v923 = vpop.f32.mrb[0].mxu0
        %v924 = vadd.f32 %v850, %v923
        %v925 = vpop.f32.mrb[0].mxu0
        %926 = vmatprep.mubr.f32.mxu0 0.0
        %927 = vmatmul.mubr.f32.gmra.mrb[0].mxu0 %v815
        %v928 = vpop.f32.mrb[0].mxu0
        %v929 = vadd.f32 %v850, %v928
        %v930 = vpop.f32.mrb[0].mxu0
        %931 = vmatprep.mubr.f32.mxu0 0.0
        %932 = vmatmul.mubr.f32.gmra.mrb[0].mxu0 %v816
        %v933 = vpop.f32.mrb[0].mxu0
        %v934 = vadd.f32 %v850, %v933
        %v935 = vpop.f32.mrb[0].mxu0
        %936 = vmatprep.mubr.f32.mxu0 0.0
        %937 = vmatmul.mubr.f32.gmra.mrb[0].mxu0 %v817
        %v938 = vpop.f32.mrb[0].mxu0
        %v939 = vadd.f32 %v850, %v938
        %v940 = vpop.f32.mrb[0].mxu0
        %941 = vmatprep.mubr.f32.mxu0 0.0
        %942 = vmatmul.mubr.f32.gmra.mrb[0].mxu0 %v818
        %v943 = vpop.f32.mrb[0].mxu0
        %v944 = vadd.f32 %v850, %v943
        %v945 = vpop.f32.mrb[0].mxu0
        %946 = vmatprep.mubr.f32.mxu0 0.0
        %947 = vmatmul.mubr.f32.gmra.mrb[0].mxu0 %v819
        %v948 = vpop.f32.mrb[0].mxu0
        %v949 = vadd.f32 %v850, %v948
        %v950 = vpop.f32.mrb[0].mxu0
        %951 = vmatprep.mubr.f32.mxu0 0.0
        %952 = vmatmul.mubr.f32.gmra.mrb[0].mxu0 %v820
        %v953 = vpop.f32.mrb[0].mxu0
        %v954 = vadd.f32 %v850, %v953
        %v955 = vpop.f32.mrb[0].mxu0
        %956 = vmatprep.mubr.f32.mxu0 0.0
        %957 = vmatmul.mubr.f32.gmra.mrb[0].mxu0 %v821
        %v958 = vpop.f32.mrb[0].mxu0
        %v959 = vadd.f32 %v850, %v958
        %v960 = vpop.f32.mrb[0].mxu0
        %961 = vmatprep.mubr.f32.mxu0 0.0
        %962 = vmatmul.mubr.f32.gmra.mrb[0].mxu0 %v822
        %v963 = vpop.f32.mrb[0].mxu0
        %v964 = vadd.f32 %v850, %v963
        %v965 = vpop.f32.mrb[0].mxu0
        %966 = vmatprep.mubr.f32.mxu0 0.0
        %967 = vmatmul.mubr.f32.gmra.mrb[0].mxu0 %v823
        %v968 = vpop.f32.mrb[0].mxu0
        %v969 = vadd.f32 %v850, %v968
        %v970 = vpop.f32.mrb[0].mxu0
        %971 = vmatprep.mubr.f32.mxu0 0.0
        %972 = vmatmul.mubr.f32.gmra.mrb[0].mxu0 %v824
        %v973 = vpop.f32.mrb[0].mxu0
        %v974 = vadd.f32 %v850, %v973
        %v975 = vpop.f32.mrb[0].mxu0
        %976 = vmatprep.mubr.f32.mxu0 0.0
        %977 = vmatmul.mubr.f32.gmra.mrb[0].mxu0 %v825
        %v978 = vpop.f32.mrb[0].mxu0
        %v979 = vadd.f32 %v850, %v978
        %v980 = vpop.f32.mrb[0].mxu0
        %981 = vmatprep.mubr.f32.mxu0 0.0
        %982 = vmatmul.mubr.f32.gmra.mrb[0].mxu0 %v826
        %v983 = vpop.f32.mrb[0].mxu0
        %v984 = vadd.f32 %v850, %v983
        %v985 = vpop.f32.mrb[0].mxu0
        %986 = vmatprep.mubr.f32.mxu0 0.0
        %987 = vmatmul.mubr.f32.gmra.mrb[0].mxu0 %v827
        %v988 = vpop.f32.mrb[0].mxu0
        %v989 = vadd.f32 %v850, %v988
        %v990 = vpop.f32.mrb[0].mxu0
        %991 = vmatprep.mubr.f32.mxu0 0.0
        %992 = vmatmul.mubr.f32.gmra.mrb[0].mxu0 %v828
        %v993 = vpop.f32.mrb[0].mxu0
        %v994 = vadd.f32 %v850, %v993
        %v995 = vpop.f32.mrb[0].mxu0
        %996 = vdwg.mxu0
        %v997 = vmul.f32 %v919, 0.2
        %v998 = vmul.f32 %v924, 0.2
        %v999 = vmul.f32 %v929, 0.2
        %v1000 = vmul.f32 %v934, 0.2
        %v1001 = vmul.f32 %v939, 0.2
        %v1002 = vmul.f32 %v944, 0.2
        %v1003 = vmul.f32 %v949, 0.2
        %v1004 = vmul.f32 %v954, 0.2
        %v1005 = vmul.f32 %v959, 0.2
        %v1006 = vmul.f32 %v964, 0.2
        %v1007 = vmul.f32 %v969, 0.2
        %v1008 = vmul.f32 %v974, 0.2
        %v1009 = vmul.f32 %v979, 0.2
        %v1010 = vmul.f32 %v984, 0.2
        %v1011 = vmul.f32 %v989, 0.2
        %v1012 = vmul.f32 %v994, 0.2
        %v1013 = vmax.f32 %v919, %v997
        %v1014 = vmax.f32 %v924, %v998
        %v1015 = vmax.f32 %v929, %v999
        %v1016 = vmax.f32 %v934, %v1000
        %v1017 = vmax.f32 %v939, %v1001
        %v1018 = vmax.f32 %v944, %v1002
        %v1019 = vmax.f32 %v949, %v1003
        %v1020 = vmax.f32 %v954, %v1004
        %v1021 = vmax.f32 %v959, %v1005
        %v1022 = vmax.f32 %v964, %v1006
        %v1023 = vmax.f32 %v969, %v1007
        %v1024 = vmax.f32 %v974, %v1008
        %v1025 = vmax.f32 %v979, %v1009
        %v1026 = vmax.f32 %v984, %v1010
        %v1027 = vmax.f32 %v989, %v1011
        %v1028 = vmax.f32 %v994, %v1012
        %v1029 = vld [vmem:[#allocation2] sm:$0xff]
        %v1030 = vld [vmem:[#allocation2 + $0x8] sm:$0xff]
        %v1031 = vld [vmem:[#allocation2 + $0x10] sm:$0xff]
        %v1032 = vld [vmem:[#allocation2 + $0x18] sm:$0xff]
        %v1033 = vld [vmem:[#allocation2 + $0x20] sm:$0xff]
        %v1034 = vld [vmem:[#allocation2 + $0x28] sm:$0xff]
        %v1035 = vld [vmem:[#allocation2 + $0x30] sm:$0xff]
        %v1036 = vld [vmem:[#allocation2 + $0x38] sm:$0xff]
        %v1037 = vld [vmem:[#allocation2 + $0x40] sm:$0xff]
        %v1038 = vld [vmem:[#allocation2 + $0x48] sm:$0xff]
        %v1039 = vld [vmem:[#allocation2 + $0x50] sm:$0xff]
        %v1040 = vld [vmem:[#allocation2 + $0x58] sm:$0xff]
        %v1041 = vld [vmem:[#allocation2 + $0x60] sm:$0xff]
        %v1042 = vld [vmem:[#allocation2 + $0x68] sm:$0xff]
        %v1043 = vld [vmem:[#allocation2 + $0x70] sm:$0xff]
        %v1044 = vld [vmem:[#allocation2 + $0x78] sm:$0xff]
        %v1045 = vld [vmem:[%s5 + $0x3] sm:$0x1]
        %v1047 = vlaneseq
        %v1048 = vshrl.u32 %v1047, 7
        %v1049 = vsub.s32 0, %v1048
        %v1050 = vrot.slane %v1045, %v1049
        %1052 = vmatprep.subr.mxu0 0.0
        %1053 = vmatpush1.msra.mxu0 %v1029
        %1054 = vmatprep.subr.mxu0 0.0
        %1055 = vmatpush1.msra.mxu0 %v1030
        %1056 = vmatprep.subr.mxu0 0.0
        %1057 = vmatpush1.msra.mxu0 %v1031
        %1058 = vmatprep.subr.mxu0 0.0
        %1059 = vmatpush1.msra.mxu0 %v1032
        %1060 = vmatprep.subr.mxu0 0.0
        %1061 = vmatpush1.msra.mxu0 %v1033
        %1062 = vmatprep.subr.mxu0 0.0
        %1063 = vmatpush1.msra.mxu0 %v1034
        %1064 = vmatprep.subr.mxu0 0.0
        %1065 = vmatpush1.msra.mxu0 %v1035
        %1066 = vmatprep.subr.mxu0 0.0
        %1067 = vmatpush1.msra.mxu0 %v1036
        %1068 = vmatprep.subr.mxu0 0.0
        %1069 = vmatpush1.msra.mxu0 %v1037
        %1070 = vmatprep.subr.mxu0 0.0
        %1071 = vmatpush1.msra.mxu0 %v1038
        %1072 = vmatprep.subr.mxu0 0.0
        %1073 = vmatpush1.msra.mxu0 %v1039
        %1074 = vmatprep.subr.mxu0 0.0
        %1075 = vmatpush1.msra.mxu0 %v1040
        %1076 = vmatprep.subr.mxu0 0.0
        %1077 = vmatpush1.msra.mxu0 %v1041
        %1078 = vmatprep.subr.mxu0 0.0
        %1079 = vmatpush1.msra.mxu0 %v1042
        %1080 = vmatprep.subr.mxu0 0.0
        %1081 = vmatpush1.msra.mxu0 %v1043
        %1082 = vmatprep.subr.mxu0 0.0
        %1083 = vmatpush1.msra.mxu0 %v1044
        %1084 = vmatprep.subr.mxu0 0.0
        %1085 = vmatpush1.msra.mxu0 0.0
        %1086 = vmatprep.subr.mxu0 0.0
        %1087 = vmatpush1.msra.mxu0 0.0
        %1088 = vmatprep.subr.mxu0 0.0
        %1089 = vmatpush1.msra.mxu0 0.0
        %1090 = vmatprep.subr.mxu0 0.0
        %1091 = vmatpush1.msra.mxu0 0.0
        %1092 = vmatprep.subr.mxu0 0.0
        %1093 = vmatpush1.msra.mxu0 0.0
        %1094 = vmatprep.subr.mxu0 0.0
        %1095 = vmatpush1.msra.mxu0 0.0
        %1096 = vmatprep.subr.mxu0 0.0
        %1097 = vmatpush1.msra.mxu0 0.0
        %1098 = vmatprep.subr.mxu0 0.0
        %1099 = vmatpush1.msra.mxu0 0.0
        %1100 = vmatprep.subr.mxu0 0.0
        %1101 = vmatpush1.msra.mxu0 0.0
        %1102 = vmatprep.subr.mxu0 0.0
        %1103 = vmatpush1.msra.mxu0 0.0
        %1104 = vmatprep.subr.mxu0 0.0
        %1105 = vmatpush1.msra.mxu0 0.0
        %1106 = vmatprep.subr.mxu0 0.0
        %1107 = vmatpush1.msra.mxu0 0.0
        %1108 = vmatprep.subr.mxu0 0.0
        %1109 = vmatpush1.msra.mxu0 0.0
        %1110 = vmatprep.subr.mxu0 0.0
        %1111 = vmatpush1.msra.mxu0 0.0
        %1112 = vmatprep.subr.mxu0 0.0
        %1113 = vmatpush1.msra.mxu0 0.0
        %1114 = vmatprep.subr.mxu0 0.0
        %1115 = vmatpush1.msra.mxu0 0.0
        %1116 = vmatprep.mubr.f32.mxu0 0.0
        %1117 = vmatmul.mubr.f32.gmra.mrb[0].mxu0 %v1013
        %v1118 = vpop.f32.mrb[0].mxu0
        %v1119 = vadd.f32 %v1050, %v1118
        %v1120 = vpop.f32.mrb[0].mxu0
        %1121 = vmatprep.mubr.f32.mxu0 0.0
        %1122 = vmatmul.mubr.f32.gmra.mrb[0].mxu0 %v1014
        %v1123 = vpop.f32.mrb[0].mxu0
        %v1124 = vadd.f32 %v1050, %v1123
        %v1125 = vpop.f32.mrb[0].mxu0
        %1126 = vmatprep.mubr.f32.mxu0 0.0
        %1127 = vmatmul.mubr.f32.gmra.mrb[0].mxu0 %v1015
        %v1128 = vpop.f32.mrb[0].mxu0
        %v1129 = vadd.f32 %v1050, %v1128
        %v1130 = vpop.f32.mrb[0].mxu0
        %1131 = vmatprep.mubr.f32.mxu0 0.0
        %1132 = vmatmul.mubr.f32.gmra.mrb[0].mxu0 %v1016
        %v1133 = vpop.f32.mrb[0].mxu0
        %v1134 = vadd.f32 %v1050, %v1133
        %v1135 = vpop.f32.mrb[0].mxu0
        %1136 = vmatprep.mubr.f32.mxu0 0.0
        %1137 = vmatmul.mubr.f32.gmra.mrb[0].mxu0 %v1017
        %v1138 = vpop.f32.mrb[0].mxu0
        %v1139 = vadd.f32 %v1050, %v1138
        %v1140 = vpop.f32.mrb[0].mxu0
        %1141 = vmatprep.mubr.f32.mxu0 0.0
        %1142 = vmatmul.mubr.f32.gmra.mrb[0].mxu0 %v1018
        %v1143 = vpop.f32.mrb[0].mxu0
        %v1144 = vadd.f32 %v1050, %v1143
        %v1145 = vpop.f32.mrb[0].mxu0
        %1146 = vmatprep.mubr.f32.mxu0 0.0
        %1147 = vmatmul.mubr.f32.gmra.mrb[0].mxu0 %v1019
        %v1148 = vpop.f32.mrb[0].mxu0
        %v1149 = vadd.f32 %v1050, %v1148
        %v1150 = vpop.f32.mrb[0].mxu0
        %1151 = vmatprep.mubr.f32.mxu0 0.0
        %1152 = vmatmul.mubr.f32.gmra.mrb[0].mxu0 %v1020
        %v1153 = vpop.f32.mrb[0].mxu0
        %v1154 = vadd.f32 %v1050, %v1153
        %v1155 = vpop.f32.mrb[0].mxu0
        %1156 = vmatprep.mubr.f32.mxu0 0.0
        %1157 = vmatmul.mubr.f32.gmra.mrb[0].mxu0 %v1021
        %v1158 = vpop.f32.mrb[0].mxu0
        %v1159 = vadd.f32 %v1050, %v1158
        %v1160 = vpop.f32.mrb[0].mxu0
        %1161 = vmatprep.mubr.f32.mxu0 0.0
        %1162 = vmatmul.mubr.f32.gmra.mrb[0].mxu0 %v1022
        %v1163 = vpop.f32.mrb[0].mxu0
        %v1164 = vadd.f32 %v1050, %v1163
        %v1165 = vpop.f32.mrb[0].mxu0
        %1166 = vmatprep.mubr.f32.mxu0 0.0
        %1167 = vmatmul.mubr.f32.gmra.mrb[0].mxu0 %v1023
        %v1168 = vpop.f32.mrb[0].mxu0
        %v1169 = vadd.f32 %v1050, %v1168
        %v1170 = vpop.f32.mrb[0].mxu0
        %1171 = vmatprep.mubr.f32.mxu0 0.0
        %1172 = vmatmul.mubr.f32.gmra.mrb[0].mxu0 %v1024
        %v1173 = vpop.f32.mrb[0].mxu0
        %v1174 = vadd.f32 %v1050, %v1173
        %v1175 = vpop.f32.mrb[0].mxu0
        %1176 = vmatprep.mubr.f32.mxu0 0.0
        %1177 = vmatmul.mubr.f32.gmra.mrb[0].mxu0 %v1025
        %v1178 = vpop.f32.mrb[0].mxu0
        %v1179 = vadd.f32 %v1050, %v1178
        %v1180 = vpop.f32.mrb[0].mxu0
        %1181 = vmatprep.mubr.f32.mxu0 0.0
        %1182 = vmatmul.mubr.f32.gmra.mrb[0].mxu0 %v1026
        %v1183 = vpop.f32.mrb[0].mxu0
        %v1184 = vadd.f32 %v1050, %v1183
        %v1185 = vpop.f32.mrb[0].mxu0
        %1186 = vmatprep.mubr.f32.mxu0 0.0
        %1187 = vmatmul.mubr.f32.gmra.mrb[0].mxu0 %v1027
        %v1188 = vpop.f32.mrb[0].mxu0
        %v1189 = vadd.f32 %v1050, %v1188
        %v1190 = vpop.f32.mrb[0].mxu0
        %1191 = vmatprep.mubr.f32.mxu0 0.0
        %1192 = vmatmul.mubr.f32.gmra.mrb[0].mxu0 %v1028
        %v1193 = vpop.f32.mrb[0].mxu0
        %v1194 = vadd.f32 %v1050, %v1193
        %v1195 = vpop.f32.mrb[0].mxu0
        %1196 = vdwg.mxu0
        %v1197 = vld [vmem:[%s330] sm:$0xf]
        %v1198 = vld [vmem:[%s330 + $0xc] sm:$0xf]
        %v1199 = vld [vmem:[%s330 + $0x18] sm:$0xf]
        %v1200 = vld [vmem:[%s330 + $0x24] sm:$0xf]
        %v1201 = vld [vmem:[%s330 + $0x30] sm:$0xf]
        %v1202 = vld [vmem:[%s330 + $0x3c] sm:$0xf]
        %v1203 = vld [vmem:[%s330 + $0x48] sm:$0xf]
        %v1204 = vld [vmem:[%s330 + $0x54] sm:$0xf]
        %v1205 = vld [vmem:[%s330 + $0x60] sm:$0xf]
        %v1206 = vld [vmem:[%s330 + $0x6c] sm:$0xf]
        %v1207 = vld [vmem:[%s330 + $0x78] sm:$0xf]
        %v1208 = vld [vmem:[%s330 + $0x84] sm:$0xf]
        %v1209 = vld [vmem:[%s330 + $0x90] sm:$0xf]
        %v1210 = vld [vmem:[%s330 + $0x9c] sm:$0xf]
        %v1211 = vld [vmem:[%s330 + $0xa8] sm:$0xf]
        %v1212 = vld [vmem:[%s330 + $0xb4] sm:$0xf]
        %v1213 = vunpack.c.l.bf16 %v1197
        %v1214 = vunpack.c.l.bf16 %v1198
        %v1215 = vunpack.c.l.bf16 %v1199
        %v1216 = vunpack.c.l.bf16 %v1200
        %v1217 = vunpack.c.l.bf16 %v1201
        %v1218 = vunpack.c.l.bf16 %v1202
        %v1219 = vunpack.c.l.bf16 %v1203
        %v1220 = vunpack.c.l.bf16 %v1204
        %v1221 = vunpack.c.l.bf16 %v1205
        %v1222 = vunpack.c.l.bf16 %v1206
        %v1223 = vunpack.c.l.bf16 %v1207
        %v1224 = vunpack.c.l.bf16 %v1208
        %v1225 = vunpack.c.l.bf16 %v1209
        %v1226 = vunpack.c.l.bf16 %v1210
        %v1227 = vunpack.c.l.bf16 %v1211
        %v1228 = vunpack.c.l.bf16 %v1212
        %v1229 = vld [vmem:[%s330 + $0x4] sm:$0xf]
        %v1230 = vld [vmem:[%s330 + $0x10] sm:$0xf]
        %v1231 = vld [vmem:[%s330 + $0x1c] sm:$0xf]
        %v1232 = vld [vmem:[%s330 + $0x28] sm:$0xf]
        %v1233 = vld [vmem:[%s330 + $0x34] sm:$0xf]
        %v1234 = vld [vmem:[%s330 + $0x40] sm:$0xf]
        %v1235 = vld [vmem:[%s330 + $0x4c] sm:$0xf]
        %v1236 = vld [vmem:[%s330 + $0x58] sm:$0xf]
        %v1237 = vld [vmem:[%s330 + $0x64] sm:$0xf]
        %v1238 = vld [vmem:[%s330 + $0x70] sm:$0xf]
        %v1239 = vld [vmem:[%s330 + $0x7c] sm:$0xf]
        %v1240 = vld [vmem:[%s330 + $0x88] sm:$0xf]
        %v1241 = vld [vmem:[%s330 + $0x94] sm:$0xf]
        %v1242 = vld [vmem:[%s330 + $0xa0] sm:$0xf]
        %v1243 = vld [vmem:[%s330 + $0xac] sm:$0xf]
        %v1244 = vld [vmem:[%s330 + $0xb8] sm:$0xf]
        %v1245 = vunpack.c.l.bf16 %v1229
        %v1246 = vunpack.c.l.bf16 %v1230
        %v1247 = vunpack.c.l.bf16 %v1231
        %v1248 = vunpack.c.l.bf16 %v1232
        %v1249 = vunpack.c.l.bf16 %v1233
        %v1250 = vunpack.c.l.bf16 %v1234
        %v1251 = vunpack.c.l.bf16 %v1235
        %v1252 = vunpack.c.l.bf16 %v1236
        %v1253 = vunpack.c.l.bf16 %v1237
        %v1254 = vunpack.c.l.bf16 %v1238
        %v1255 = vunpack.c.l.bf16 %v1239
        %v1256 = vunpack.c.l.bf16 %v1240
        %v1257 = vunpack.c.l.bf16 %v1241
        %v1258 = vunpack.c.l.bf16 %v1242
        %v1259 = vunpack.c.l.bf16 %v1243
        %v1260 = vunpack.c.l.bf16 %v1244
        %v1261 = vld [vmem:[%s330 + $0x8] sm:$0xf]
        %v1262 = vld [vmem:[%s330 + $0x14] sm:$0xf]
        %v1263 = vld [vmem:[%s330 + $0x20] sm:$0xf]
        %v1264 = vld [vmem:[%s330 + $0x2c] sm:$0xf]
        %v1265 = vld [vmem:[%s330 + $0x38] sm:$0xf]
        %v1266 = vld [vmem:[%s330 + $0x44] sm:$0xf]
        %v1267 = vld [vmem:[%s330 + $0x50] sm:$0xf]
        %v1268 = vld [vmem:[%s330 + $0x5c] sm:$0xf]
        %v1269 = vld [vmem:[%s330 + $0x68] sm:$0xf]
        %v1270 = vld [vmem:[%s330 + $0x74] sm:$0xf]
        %v1271 = vld [vmem:[%s330 + $0x80] sm:$0xf]
        %v1272 = vld [vmem:[%s330 + $0x8c] sm:$0xf]
        %v1273 = vld [vmem:[%s330 + $0x98] sm:$0xf]
        %v1274 = vld [vmem:[%s330 + $0xa4] sm:$0xf]
        %v1275 = vld [vmem:[%s330 + $0xb0] sm:$0xf]
        %v1276 = vld [vmem:[%s330 + $0xbc] sm:$0xf]
        %v1277 = vunpack.c.l.bf16 %v1261
        %v1278 = vunpack.c.l.bf16 %v1262
        %v1279 = vunpack.c.l.bf16 %v1263
        %v1280 = vunpack.c.l.bf16 %v1264
        %v1281 = vunpack.c.l.bf16 %v1265
        %v1282 = vunpack.c.l.bf16 %v1266
        %v1283 = vunpack.c.l.bf16 %v1267
        %v1284 = vunpack.c.l.bf16 %v1268
        %v1285 = vunpack.c.l.bf16 %v1269
        %v1286 = vunpack.c.l.bf16 %v1270
        %v1287 = vunpack.c.l.bf16 %v1271
        %v1288 = vunpack.c.l.bf16 %v1272
        %v1289 = vunpack.c.l.bf16 %v1273
        %v1290 = vunpack.c.l.bf16 %v1274
        %v1291 = vunpack.c.l.bf16 %v1275
        %v1292 = vunpack.c.l.bf16 %v1276
        %vm1293 = vcmp.gt.f32.partialorder %v1213, 0.0
        %vm1294 = vcmp.gt.f32.partialorder %v1214, 0.0
        %vm1295 = vcmp.gt.f32.partialorder %v1215, 0.0
        %vm1296 = vcmp.gt.f32.partialorder %v1216, 0.0
        %vm1297 = vcmp.gt.f32.partialorder %v1217, 0.0
        %vm1298 = vcmp.gt.f32.partialorder %v1218, 0.0
        %vm1299 = vcmp.gt.f32.partialorder %v1219, 0.0
        %vm1300 = vcmp.gt.f32.partialorder %v1220, 0.0
        %vm1301 = vcmp.gt.f32.partialorder %v1221, 0.0
        %vm1302 = vcmp.gt.f32.partialorder %v1222, 0.0
        %vm1303 = vcmp.gt.f32.partialorder %v1223, 0.0
        %vm1304 = vcmp.gt.f32.partialorder %v1224, 0.0
        %vm1305 = vcmp.gt.f32.partialorder %v1225, 0.0
        %vm1306 = vcmp.gt.f32.partialorder %v1226, 0.0
        %vm1307 = vcmp.gt.f32.partialorder %v1227, 0.0
        %vm1308 = vcmp.gt.f32.partialorder %v1228, 0.0
        %v1309 = vsel %vm1293, %v1119, -1e+10
        %v1310 = vsel %vm1294, %v1124, -1e+10
        %v1311 = vsel %vm1295, %v1129, -1e+10
        %v1312 = vsel %vm1296, %v1134, -1e+10
        %v1313 = vsel %vm1297, %v1139, -1e+10
        %v1314 = vsel %vm1298, %v1144, -1e+10
        %v1315 = vsel %vm1299, %v1149, -1e+10
        %v1316 = vsel %vm1300, %v1154, -1e+10
        %v1317 = vsel %vm1301, %v1159, -1e+10
        %v1318 = vsel %vm1302, %v1164, -1e+10
        %v1319 = vsel %vm1303, %v1169, -1e+10
        %v1320 = vsel %vm1304, %v1174, -1e+10
        %v1321 = vsel %vm1305, %v1179, -1e+10
        %v1322 = vsel %vm1306, %v1184, -1e+10
        %v1323 = vsel %vm1307, %v1189, -1e+10
        %v1324 = vsel %vm1308, %v1194, -1e+10
        %1325 = vmax.xlane.f32.xlu0 %v1309
        %v1326 = vpop.xlane.xlu0 %1325
        %1327 = vmax.xlane.f32.xlu0 %v1310
        %v1328 = vpop.xlane.xlu0 %1327
        %1329 = vmax.xlane.f32.xlu0 %v1311
        %v1330 = vpop.xlane.xlu0 %1329
        %1331 = vmax.xlane.f32.xlu0 %v1312
        %v1332 = vpop.xlane.xlu0 %1331
        %1333 = vmax.xlane.f32.xlu0 %v1313
        %v1334 = vpop.xlane.xlu0 %1333
        %1335 = vmax.xlane.f32.xlu0 %v1314
        %v1336 = vpop.xlane.xlu0 %1335
        %1337 = vmax.xlane.f32.xlu0 %v1315
        %v1338 = vpop.xlane.xlu0 %1337
        %1339 = vmax.xlane.f32.xlu0 %v1316
        %v1340 = vpop.xlane.xlu0 %1339
        %1341 = vmax.xlane.f32.xlu0 %v1317
        %v1342 = vpop.xlane.xlu0 %1341
        %1343 = vmax.xlane.f32.xlu0 %v1318
        %v1344 = vpop.xlane.xlu0 %1343
        %1345 = vmax.xlane.f32.xlu0 %v1319
        %v1346 = vpop.xlane.xlu0 %1345
        %1347 = vmax.xlane.f32.xlu0 %v1320
        %v1348 = vpop.xlane.xlu0 %1347
        %1349 = vmax.xlane.f32.xlu0 %v1321
        %v1350 = vpop.xlane.xlu0 %1349
        %1351 = vmax.xlane.f32.xlu0 %v1322
        %v1352 = vpop.xlane.xlu0 %1351
        %1353 = vmax.xlane.f32.xlu0 %v1323
        %v1354 = vpop.xlane.xlu0 %1353
        %1355 = vmax.xlane.f32.xlu0 %v1324
        %v1356 = vpop.xlane.xlu0 %1355
        %v1357 = vsub.f32 %v1309, %v1326
        %v1358 = vsub.f32 %v1310, %v1328
        %v1359 = vsub.f32 %v1311, %v1330
        %v1360 = vsub.f32 %v1312, %v1332
        %v1361 = vsub.f32 %v1313, %v1334
        %v1362 = vsub.f32 %v1314, %v1336
        %v1363 = vsub.f32 %v1315, %v1338
        %v1364 = vsub.f32 %v1316, %v1340
        %v1365 = vsub.f32 %v1317, %v1342
        %v1366 = vsub.f32 %v1318, %v1344
        %v1367 = vsub.f32 %v1319, %v1346
        %v1368 = vsub.f32 %v1320, %v1348
        %v1369 = vsub.f32 %v1321, %v1350
        %v1370 = vsub.f32 %v1322, %v1352
        %v1371 = vsub.f32 %v1323, %v1354
        %v1372 = vsub.f32 %v1324, %v1356
        %v1373 = vmul.f32 %v1357, 1.442695
        %v1374 = vpow.pop %v1373
        %v1375 = vmul.f32 %v1358, 1.442695
        %v1376 = vpow.pop %v1375
        %v1377 = vmul.f32 %v1359, 1.442695
        %v1378 = vpow.pop %v1377
        %v1379 = vmul.f32 %v1360, 1.442695
        %v1380 = vpow.pop %v1379
        %v1381 = vmul.f32 %v1361, 1.442695
        %v1382 = vpow.pop %v1381
        %v1383 = vmul.f32 %v1362, 1.442695
        %v1384 = vpow.pop %v1383
        %v1385 = vmul.f32 %v1363, 1.442695
        %v1386 = vpow.pop %v1385
        %v1387 = vmul.f32 %v1364, 1.442695
        %v1388 = vpow.pop %v1387
        %v1389 = vmul.f32 %v1365, 1.442695
        %v1390 = vpow.pop %v1389
        %v1391 = vmul.f32 %v1366, 1.442695
        %v1392 = vpow.pop %v1391
        %v1393 = vmul.f32 %v1367, 1.442695
        %v1394 = vpow.pop %v1393
        %v1395 = vmul.f32 %v1368, 1.442695
        %v1396 = vpow.pop %v1395
        %v1397 = vmul.f32 %v1369, 1.442695
        %v1398 = vpow.pop %v1397
        %v1399 = vmul.f32 %v1370, 1.442695
        %v1400 = vpow.pop %v1399
        %v1401 = vmul.f32 %v1371, 1.442695
        %v1402 = vpow.pop %v1401
        %v1403 = vmul.f32 %v1372, 1.442695
        %v1404 = vpow.pop %v1403
        %v1405 = vsel %vm1293, %v1374, 0.0
        %v1406 = vsel %vm1294, %v1376, 0.0
        %v1407 = vsel %vm1295, %v1378, 0.0
        %v1408 = vsel %vm1296, %v1380, 0.0
        %v1409 = vsel %vm1297, %v1382, 0.0
        %v1410 = vsel %vm1298, %v1384, 0.0
        %v1411 = vsel %vm1299, %v1386, 0.0
        %v1412 = vsel %vm1300, %v1388, 0.0
        %v1413 = vsel %vm1301, %v1390, 0.0
        %v1414 = vsel %vm1302, %v1392, 0.0
        %v1415 = vsel %vm1303, %v1394, 0.0
        %v1416 = vsel %vm1304, %v1396, 0.0
        %v1417 = vsel %vm1305, %v1398, 0.0
        %v1418 = vsel %vm1306, %v1400, 0.0
        %v1419 = vsel %vm1307, %v1402, 0.0
        %v1420 = vsel %vm1308, %v1404, 0.0
        %v1421 = vld [vmem:[#allocation5] sm:$0xff]
        %v1422 = vld [vmem:[#allocation5 + $0x8] sm:$0xff]
        %v1423 = vld [vmem:[#allocation5 + $0x10] sm:$0xff]
        %v1424 = vld [vmem:[#allocation5 + $0x18] sm:$0xff]
        %v1425 = vld [vmem:[#allocation5 + $0x20] sm:$0xff]
        %v1426 = vld [vmem:[#allocation5 + $0x28] sm:$0xff]
        %v1427 = vld [vmem:[#allocation5 + $0x30] sm:$0xff]
        %v1428 = vld [vmem:[#allocation5 + $0x38] sm:$0xff]
        %v1429 = vld [vmem:[#allocation5 + $0x40] sm:$0xff]
        %v1430 = vld [vmem:[#allocation5 + $0x48] sm:$0xff]
        %v1431 = vld [vmem:[#allocation5 + $0x50] sm:$0xff]
        %v1432 = vld [vmem:[#allocation5 + $0x58] sm:$0xff]
        %v1433 = vld [vmem:[#allocation5 + $0x60] sm:$0xff]
        %v1434 = vld [vmem:[#allocation5 + $0x68] sm:$0xff]
        %v1435 = vld [vmem:[#allocation5 + $0x70] sm:$0xff]
        %v1436 = vld [vmem:[#allocation5 + $0x78] sm:$0xff]
        %1437 = vmatprep.subr.mxu0 0.0
        %1438 = vmatpush1.msra.mxu0 %v1421
        %1439 = vmatprep.subr.mxu0 0.0
        %1440 = vmatpush1.msra.mxu0 %v1422
        %1441 = vmatprep.subr.mxu0 0.0
        %1442 = vmatpush1.msra.mxu0 %v1423
        %1443 = vmatprep.subr.mxu0 0.0
        %1444 = vmatpush1.msra.mxu0 %v1424
        %1445 = vmatprep.subr.mxu0 0.0
        %1446 = vmatpush1.msra.mxu0 %v1425
        %1447 = vmatprep.subr.mxu0 0.0
        %1448 = vmatpush1.msra.mxu0 %v1426
        %1449 = vmatprep.subr.mxu0 0.0
        %1450 = vmatpush1.msra.mxu0 %v1427
        %1451 = vmatprep.subr.mxu0 0.0
        %1452 = vmatpush1.msra.mxu0 %v1428
        %1453 = vmatprep.subr.mxu0 0.0
        %1454 = vmatpush1.msra.mxu0 %v1429
        %1455 = vmatprep.subr.mxu0 0.0
        %1456 = vmatpush1.msra.mxu0 %v1430
        %1457 = vmatprep.subr.mxu0 0.0
        %1458 = vmatpush1.msra.mxu0 %v1431
        %1459 = vmatprep.subr.mxu0 0.0
        %1460 = vmatpush1.msra.mxu0 %v1432
        %1461 = vmatprep.subr.mxu0 0.0
        %1462 = vmatpush1.msra.mxu0 %v1433
        %1463 = vmatprep.subr.mxu0 0.0
        %1464 = vmatpush1.msra.mxu0 %v1434
        %1465 = vmatprep.subr.mxu0 0.0
        %1466 = vmatpush1.msra.mxu0 %v1435
        %1467 = vmatprep.subr.mxu0 0.0
        %1468 = vmatpush1.msra.mxu0 %v1436
        %1469 = vmatprep.subr.mxu0 0.0
        %1470 = vmatpush1.msra.mxu0 0.0
        %1471 = vmatprep.subr.mxu0 0.0
        %1472 = vmatpush1.msra.mxu0 0.0
        %1473 = vmatprep.subr.mxu0 0.0
        %1474 = vmatpush1.msra.mxu0 0.0
        %1475 = vmatprep.subr.mxu0 0.0
        %1476 = vmatpush1.msra.mxu0 0.0
        %1477 = vmatprep.subr.mxu0 0.0
        %1478 = vmatpush1.msra.mxu0 0.0
        %1479 = vmatprep.subr.mxu0 0.0
        %1480 = vmatpush1.msra.mxu0 0.0
        %1481 = vmatprep.subr.mxu0 0.0
        %1482 = vmatpush1.msra.mxu0 0.0
        %1483 = vmatprep.subr.mxu0 0.0
        %1484 = vmatpush1.msra.mxu0 0.0
        %1485 = vmatprep.subr.mxu0 0.0
        %1486 = vmatpush1.msra.mxu0 0.0
        %1487 = vmatprep.subr.mxu0 0.0
        %1488 = vmatpush1.msra.mxu0 0.0
        %1489 = vmatprep.subr.mxu0 0.0
        %1490 = vmatpush1.msra.mxu0 0.0
        %1491 = vmatprep.subr.mxu0 0.0
        %1492 = vmatpush1.msra.mxu0 0.0
        %1493 = vmatprep.subr.mxu0 0.0
        %1494 = vmatpush1.msra.mxu0 0.0
        %1495 = vmatprep.subr.mxu0 0.0
        %1496 = vmatpush1.msra.mxu0 0.0
        %1497 = vmatprep.subr.mxu0 0.0
        %1498 = vmatpush1.msra.mxu0 0.0
        %1499 = vmatprep.subr.mxu0 0.0
        %1500 = vmatpush1.msra.mxu0 0.0
        %1501 = vmatprep.mubr.f32.mxu0 0.0
        %1502 = vmatmul.mubr.f32.gmra.mrb[0].mxu0 %v1405
        %v1503 = vpop.f32.mrb[0].mxu0
        %v1504 = vadd.f32 0.0, %v1503
        %v1505 = vpop.f32.mrb[0].mxu0
        %1506 = vmatprep.mubr.f32.mxu0 0.0
        %1507 = vmatmul.mubr.f32.gmra.mrb[0].mxu0 %v1406
        %v1508 = vpop.f32.mrb[0].mxu0
        %v1509 = vadd.f32 0.0, %v1508
        %v1510 = vpop.f32.mrb[0].mxu0
        %1511 = vmatprep.mubr.f32.mxu0 0.0
        %1512 = vmatmul.mubr.f32.gmra.mrb[0].mxu0 %v1407
        %v1513 = vpop.f32.mrb[0].mxu0
        %v1514 = vadd.f32 0.0, %v1513
        %v1515 = vpop.f32.mrb[0].mxu0
        %1516 = vmatprep.mubr.f32.mxu0 0.0
        %1517 = vmatmul.mubr.f32.gmra.mrb[0].mxu0 %v1408
        %v1518 = vpop.f32.mrb[0].mxu0
        %v1519 = vadd.f32 0.0, %v1518
        %v1520 = vpop.f32.mrb[0].mxu0
        %1521 = vmatprep.mubr.f32.mxu0 0.0
        %1522 = vmatmul.mubr.f32.gmra.mrb[0].mxu0 %v1409
        %v1523 = vpop.f32.mrb[0].mxu0
        %v1524 = vadd.f32 0.0, %v1523
        %v1525 = vpop.f32.mrb[0].mxu0
        %1526 = vmatprep.mubr.f32.mxu0 0.0
        %1527 = vmatmul.mubr.f32.gmra.mrb[0].mxu0 %v1410
        %v1528 = vpop.f32.mrb[0].mxu0
        %v1529 = vadd.f32 0.0, %v1528
        %v1530 = vpop.f32.mrb[0].mxu0
        %1531 = vmatprep.mubr.f32.mxu0 0.0
        %1532 = vmatmul.mubr.f32.gmra.mrb[0].mxu0 %v1411
        %v1533 = vpop.f32.mrb[0].mxu0
        %v1534 = vadd.f32 0.0, %v1533
        %v1535 = vpop.f32.mrb[0].mxu0
        %1536 = vmatprep.mubr.f32.mxu0 0.0
        %1537 = vmatmul.mubr.f32.gmra.mrb[0].mxu0 %v1412
        %v1538 = vpop.f32.mrb[0].mxu0
        %v1539 = vadd.f32 0.0, %v1538
        %v1540 = vpop.f32.mrb[0].mxu0
        %1541 = vmatprep.mubr.f32.mxu0 0.0
        %1542 = vmatmul.mubr.f32.gmra.mrb[0].mxu0 %v1413
        %v1543 = vpop.f32.mrb[0].mxu0
        %v1544 = vadd.f32 0.0, %v1543
        %v1545 = vpop.f32.mrb[0].mxu0
        %1546 = vmatprep.mubr.f32.mxu0 0.0
        %1547 = vmatmul.mubr.f32.gmra.mrb[0].mxu0 %v1414
        %v1548 = vpop.f32.mrb[0].mxu0
        %v1549 = vadd.f32 0.0, %v1548
        %v1550 = vpop.f32.mrb[0].mxu0
        %1551 = vmatprep.mubr.f32.mxu0 0.0
        %1552 = vmatmul.mubr.f32.gmra.mrb[0].mxu0 %v1415
        %v1553 = vpop.f32.mrb[0].mxu0
        %v1554 = vadd.f32 0.0, %v1553
        %v1555 = vpop.f32.mrb[0].mxu0
        %1556 = vmatprep.mubr.f32.mxu0 0.0
        %1557 = vmatmul.mubr.f32.gmra.mrb[0].mxu0 %v1416
        %v1558 = vpop.f32.mrb[0].mxu0
        %v1559 = vadd.f32 0.0, %v1558
        %v1560 = vpop.f32.mrb[0].mxu0
        %1561 = vmatprep.mubr.f32.mxu0 0.0
        %1562 = vmatmul.mubr.f32.gmra.mrb[0].mxu0 %v1417
        %v1563 = vpop.f32.mrb[0].mxu0
        %v1564 = vadd.f32 0.0, %v1563
        %v1565 = vpop.f32.mrb[0].mxu0
        %1566 = vmatprep.mubr.f32.mxu0 0.0
        %1567 = vmatmul.mubr.f32.gmra.mrb[0].mxu0 %v1418
        %v1568 = vpop.f32.mrb[0].mxu0
        %v1569 = vadd.f32 0.0, %v1568
        %v1570 = vpop.f32.mrb[0].mxu0
        %1571 = vmatprep.mubr.f32.mxu0 0.0
        %1572 = vmatmul.mubr.f32.gmra.mrb[0].mxu0 %v1419
        %v1573 = vpop.f32.mrb[0].mxu0
        %v1574 = vadd.f32 0.0, %v1573
        %v1575 = vpop.f32.mrb[0].mxu0
        %1576 = vmatprep.mubr.f32.mxu0 0.0
        %1577 = vmatmul.mubr.f32.gmra.mrb[0].mxu0 %v1420
        %v1578 = vpop.f32.mrb[0].mxu0
        %v1579 = vadd.f32 0.0, %v1578
        %v1580 = vpop.f32.mrb[0].mxu0
        %1581 = vdwg.mxu0
        %v1582 = vmax.f32 %v1504, 1e-30
        %v1583 = vmax.f32 %v1509, 1e-30
        %v1584 = vmax.f32 %v1514, 1e-30
        %v1585 = vmax.f32 %v1519, 1e-30
        %v1586 = vmax.f32 %v1524, 1e-30
        %v1587 = vmax.f32 %v1529, 1e-30
        %v1588 = vmax.f32 %v1534, 1e-30
        %v1589 = vmax.f32 %v1539, 1e-30
        %v1590 = vmax.f32 %v1544, 1e-30
        %v1591 = vmax.f32 %v1549, 1e-30
        %v1592 = vmax.f32 %v1554, 1e-30
        %v1593 = vmax.f32 %v1559, 1e-30
        %v1594 = vmax.f32 %v1564, 1e-30
        %v1595 = vmax.f32 %v1569, 1e-30
        %v1596 = vmax.f32 %v1574, 1e-30
        %v1597 = vmax.f32 %v1579, 1e-30
        %v1598 = vrcp.pop %v1582
        %v1599 = vrcp.pop %v1583
        %v1600 = vrcp.pop %v1584
        %v1601 = vrcp.pop %v1585
        %v1602 = vrcp.pop %v1586
        %v1603 = vrcp.pop %v1587
        %v1604 = vrcp.pop %v1588
        %v1605 = vrcp.pop %v1589
        %v1606 = vrcp.pop %v1590
        %v1607 = vrcp.pop %v1591
        %v1608 = vrcp.pop %v1592
        %v1609 = vrcp.pop %v1593
        %v1610 = vrcp.pop %v1594
        %v1611 = vrcp.pop %v1595
        %v1612 = vrcp.pop %v1596
        %v1613 = vrcp.pop %v1597
        %v1614 = vmul.f32 %v1582, %v1598
        %v1615 = vmul.f32 %v1583, %v1599
        %v1616 = vmul.f32 %v1584, %v1600
        %v1617 = vmul.f32 %v1585, %v1601
        %v1618 = vmul.f32 %v1586, %v1602
        %v1619 = vmul.f32 %v1587, %v1603
        %v1620 = vmul.f32 %v1588, %v1604
        %v1621 = vmul.f32 %v1589, %v1605
        %v1622 = vmul.f32 %v1590, %v1606
        %v1623 = vmul.f32 %v1591, %v1607
        %v1624 = vmul.f32 %v1592, %v1608
        %v1625 = vmul.f32 %v1593, %v1609
        %v1626 = vmul.f32 %v1594, %v1610
        %v1627 = vmul.f32 %v1595, %v1611
        %v1628 = vmul.f32 %v1596, %v1612
        %v1629 = vmul.f32 %v1597, %v1613
        %v1630 = vsub.f32 2.0, %v1614
        %v1631 = vsub.f32 2.0, %v1615
        %v1632 = vsub.f32 2.0, %v1616
        %v1633 = vsub.f32 2.0, %v1617
        %v1634 = vsub.f32 2.0, %v1618
        %v1635 = vsub.f32 2.0, %v1619
        %v1636 = vsub.f32 2.0, %v1620
        %v1637 = vsub.f32 2.0, %v1621
        %v1638 = vsub.f32 2.0, %v1622
        %v1639 = vsub.f32 2.0, %v1623
        %v1640 = vsub.f32 2.0, %v1624
        %v1641 = vsub.f32 2.0, %v1625
        %v1642 = vsub.f32 2.0, %v1626
        %v1643 = vsub.f32 2.0, %v1627
        %v1644 = vsub.f32 2.0, %v1628
        %v1645 = vsub.f32 2.0, %v1629
        %v1646 = vmul.f32 %v1598, %v1630
        %v1647 = vmul.f32 %v1599, %v1631
        %v1648 = vmul.f32 %v1600, %v1632
        %v1649 = vmul.f32 %v1601, %v1633
        %v1650 = vmul.f32 %v1602, %v1634
        %v1651 = vmul.f32 %v1603, %v1635
        %v1652 = vmul.f32 %v1604, %v1636
        %v1653 = vmul.f32 %v1605, %v1637
        %v1654 = vmul.f32 %v1606, %v1638
        %v1655 = vmul.f32 %v1607, %v1639
        %v1656 = vmul.f32 %v1608, %v1640
        %v1657 = vmul.f32 %v1609, %v1641
        %v1658 = vmul.f32 %v1610, %v1642
        %v1659 = vmul.f32 %v1611, %v1643
        %v1660 = vmul.f32 %v1612, %v1644
        %v1661 = vmul.f32 %v1613, %v1645
        %v1662 = vmul.f32 %v1405, %v1646
        %v1663 = vmul.f32 %v1406, %v1647
        %v1664 = vmul.f32 %v1407, %v1648
        %v1665 = vmul.f32 %v1408, %v1649
        %v1666 = vmul.f32 %v1409, %v1650
        %v1667 = vmul.f32 %v1410, %v1651
        %v1668 = vmul.f32 %v1411, %v1652
        %v1669 = vmul.f32 %v1412, %v1653
        %v1670 = vmul.f32 %v1413, %v1654
        %v1671 = vmul.f32 %v1414, %v1655
        %v1672 = vmul.f32 %v1415, %v1656
        %v1673 = vmul.f32 %v1416, %v1657
        %v1674 = vmul.f32 %v1417, %v1658
        %v1675 = vmul.f32 %v1418, %v1659
        %v1676 = vmul.f32 %v1419, %v1660
        %v1677 = vmul.f32 %v1420, %v1661
        %v1678 = vmul.f32 %v1245, 0.125
        %v1679 = vmul.f32 %v1246, 0.125
        %v1680 = vmul.f32 %v1247, 0.125
        %v1681 = vmul.f32 %v1248, 0.125
        %v1682 = vmul.f32 %v1249, 0.125
        %v1683 = vmul.f32 %v1250, 0.125
        %v1684 = vmul.f32 %v1251, 0.125
        %v1685 = vmul.f32 %v1252, 0.125
        %v1686 = vmul.f32 %v1253, 0.125
        %v1687 = vmul.f32 %v1254, 0.125
        %v1688 = vmul.f32 %v1255, 0.125
        %v1689 = vmul.f32 %v1256, 0.125
        %v1690 = vmul.f32 %v1257, 0.125
        %v1691 = vmul.f32 %v1258, 0.125
        %v1692 = vmul.f32 %v1259, 0.125
        %v1693 = vmul.f32 %v1260, 0.125
        %v1694 = vxor.u32 %v1119, 2147483648
        %v1695 = vxor.u32 %v1124, 2147483648
        %v1696 = vxor.u32 %v1129, 2147483648
        %v1697 = vxor.u32 %v1134, 2147483648
        %v1698 = vxor.u32 %v1139, 2147483648
        %v1699 = vxor.u32 %v1144, 2147483648
        %v1700 = vxor.u32 %v1149, 2147483648
        %v1701 = vxor.u32 %v1154, 2147483648
        %v1702 = vxor.u32 %v1159, 2147483648
        %v1703 = vxor.u32 %v1164, 2147483648
        %v1704 = vxor.u32 %v1169, 2147483648
        %v1705 = vxor.u32 %v1174, 2147483648
        %v1706 = vxor.u32 %v1179, 2147483648
        %v1707 = vxor.u32 %v1184, 2147483648
        %v1708 = vxor.u32 %v1189, 2147483648
        %v1709 = vxor.u32 %v1194, 2147483648
        %v1710 = vmul.f32 %v1694, 1.442695
        %v1711 = vpow.pop %v1710
        %v1712 = vmul.f32 %v1695, 1.442695
        %v1713 = vpow.pop %v1712
        %v1714 = vmul.f32 %v1696, 1.442695
        %v1715 = vpow.pop %v1714
        %v1716 = vmul.f32 %v1697, 1.442695
        %v1717 = vpow.pop %v1716
        %v1718 = vmul.f32 %v1698, 1.442695
        %v1719 = vpow.pop %v1718
        %v1720 = vmul.f32 %v1699, 1.442695
        %v1721 = vpow.pop %v1720
        %v1722 = vmul.f32 %v1700, 1.442695
        %v1723 = vpow.pop %v1722
        %v1724 = vmul.f32 %v1701, 1.442695
        %v1725 = vpow.pop %v1724
        %v1726 = vmul.f32 %v1702, 1.442695
        %v1727 = vpow.pop %v1726
        %v1728 = vmul.f32 %v1703, 1.442695
        %v1729 = vpow.pop %v1728
        %v1730 = vmul.f32 %v1704, 1.442695
        %v1731 = vpow.pop %v1730
        %v1732 = vmul.f32 %v1705, 1.442695
        %v1733 = vpow.pop %v1732
        %v1734 = vmul.f32 %v1706, 1.442695
        %v1735 = vpow.pop %v1734
        %v1736 = vmul.f32 %v1707, 1.442695
        %v1737 = vpow.pop %v1736
        %v1738 = vmul.f32 %v1708, 1.442695
        %v1739 = vpow.pop %v1738
        %v1740 = vmul.f32 %v1709, 1.442695
        %v1741 = vpow.pop %v1740
        %v1742 = vadd.f32 %v1711, 1.0
        %v1743 = vadd.f32 %v1713, 1.0
        %v1744 = vadd.f32 %v1715, 1.0
        %v1745 = vadd.f32 %v1717, 1.0
        %v1746 = vadd.f32 %v1719, 1.0
        %v1747 = vadd.f32 %v1721, 1.0
        %v1748 = vadd.f32 %v1723, 1.0
        %v1749 = vadd.f32 %v1725, 1.0
        %v1750 = vadd.f32 %v1727, 1.0
        %v1751 = vadd.f32 %v1729, 1.0
        %v1752 = vadd.f32 %v1731, 1.0
        %v1753 = vadd.f32 %v1733, 1.0
        %v1754 = vadd.f32 %v1735, 1.0
        %v1755 = vadd.f32 %v1737, 1.0
        %v1756 = vadd.f32 %v1739, 1.0
        %v1757 = vadd.f32 %v1741, 1.0
        %v1758 = vrcp.pop %v1742
        %v1759 = vmul.f32 1.0, %v1758
        %v1760 = vrcp.pop %v1743
        %v1761 = vmul.f32 1.0, %v1760
        %v1762 = vrcp.pop %v1744
        %v1763 = vmul.f32 1.0, %v1762
        %v1764 = vrcp.pop %v1745
        %v1765 = vmul.f32 1.0, %v1764
        %v1766 = vrcp.pop %v1746
        %v1767 = vmul.f32 1.0, %v1766
        %v1768 = vrcp.pop %v1747
        %v1769 = vmul.f32 1.0, %v1768
        %v1770 = vrcp.pop %v1748
        %v1771 = vmul.f32 1.0, %v1770
        %v1772 = vrcp.pop %v1749
        %v1773 = vmul.f32 1.0, %v1772
        %v1774 = vrcp.pop %v1750
        %v1775 = vmul.f32 1.0, %v1774
        %v1776 = vrcp.pop %v1751
        %v1777 = vmul.f32 1.0, %v1776
        %v1778 = vrcp.pop %v1752
        %v1779 = vmul.f32 1.0, %v1778
        %v1780 = vrcp.pop %v1753
        %v1781 = vmul.f32 1.0, %v1780
        %v1782 = vrcp.pop %v1754
        %v1783 = vmul.f32 1.0, %v1782
        %v1784 = vrcp.pop %v1755
        %v1785 = vmul.f32 1.0, %v1784
        %v1786 = vrcp.pop %v1756
        %v1787 = vmul.f32 1.0, %v1786
        %v1788 = vrcp.pop %v1757
        %v1789 = vmul.f32 1.0, %v1788
        %v1790 = vmul.f32 %v1759, %v1277
        %v1791 = vmul.f32 %v1761, %v1278
        %v1792 = vmul.f32 %v1763, %v1279
        %v1793 = vmul.f32 %v1765, %v1280
        %v1794 = vmul.f32 %v1767, %v1281
        %v1795 = vmul.f32 %v1769, %v1282
        %v1796 = vmul.f32 %v1771, %v1283
        %v1797 = vmul.f32 %v1773, %v1284
        %v1798 = vmul.f32 %v1775, %v1285
        %v1799 = vmul.f32 %v1777, %v1286
        %v1800 = vmul.f32 %v1779, %v1287
        %v1801 = vmul.f32 %v1781, %v1288
        %v1802 = vmul.f32 %v1783, %v1289
        %v1803 = vmul.f32 %v1785, %v1290
        %v1804 = vmul.f32 %v1787, %v1291
        %v1805 = vmul.f32 %v1789, %v1292
        %v1806 = vadd.f32 %v1662, %v1678
        %v1807 = vadd.f32 %v1663, %v1679
        %v1808 = vadd.f32 %v1664, %v1680
        %v1809 = vadd.f32 %v1665, %v1681
        %v1810 = vadd.f32 %v1666, %v1682
        %v1811 = vadd.f32 %v1667, %v1683
        %v1812 = vadd.f32 %v1668, %v1684
        %v1813 = vadd.f32 %v1669, %v1685
        %v1814 = vadd.f32 %v1670, %v1686
        %v1815 = vadd.f32 %v1671, %v1687
        %v1816 = vadd.f32 %v1672, %v1688
        %v1817 = vadd.f32 %v1673, %v1689
        %v1818 = vadd.f32 %v1674, %v1690
        %v1819 = vadd.f32 %v1675, %v1691
        %v1820 = vadd.f32 %v1676, %v1692
        %v1821 = vadd.f32 %v1677, %v1693
        %v1822 = vadd.f32 %v1806, %v1790
        %v1823 = vadd.f32 %v1807, %v1791
        %v1824 = vadd.f32 %v1808, %v1792
        %v1825 = vadd.f32 %v1809, %v1793
        %v1826 = vadd.f32 %v1810, %v1794
        %v1827 = vadd.f32 %v1811, %v1795
        %v1828 = vadd.f32 %v1812, %v1796
        %v1829 = vadd.f32 %v1813, %v1797
        %v1830 = vadd.f32 %v1814, %v1798
        %v1831 = vadd.f32 %v1815, %v1799
        %v1832 = vadd.f32 %v1816, %v1800
        %v1833 = vadd.f32 %v1817, %v1801
        %v1834 = vadd.f32 %v1818, %v1802
        %v1835 = vadd.f32 %v1819, %v1803
        %v1836 = vadd.f32 %v1820, %v1804
        %v1837 = vadd.f32 %v1821, %v1805
        %1838 = vst [vmem:[%s367] sm:$0xff] %v1822
        %1839 = vst [vmem:[%s367 + $0x8] sm:$0xff] %v1823
        %1840 = vst [vmem:[%s367 + $0x10] sm:$0xff] %v1824
        %1841 = vst [vmem:[%s367 + $0x18] sm:$0xff] %v1825
        %1842 = vst [vmem:[%s367 + $0x20] sm:$0xff] %v1826
        %1843 = vst [vmem:[%s367 + $0x28] sm:$0xff] %v1827
        %1844 = vst [vmem:[%s367 + $0x30] sm:$0xff] %v1828
        %1845 = vst [vmem:[%s367 + $0x38] sm:$0xff] %v1829
        %1846 = vst [vmem:[%s367 + $0x40] sm:$0xff] %v1830
        %1847 = vst [vmem:[%s367 + $0x48] sm:$0xff] %v1831
        %1848 = vst [vmem:[%s367 + $0x50] sm:$0xff] %v1832
        %1849 = vst [vmem:[%s367 + $0x58] sm:$0xff] %v1833
        %1850 = vst [vmem:[%s367 + $0x60] sm:$0xff] %v1834
        %1851 = vst [vmem:[%s367 + $0x68] sm:$0xff] %v1835
        %1852 = vst [vmem:[%s367 + $0x70] sm:$0xff] %v1836
        %1853 = vst [vmem:[%s367 + $0x78] sm:$0xff] %v1837
        %s1854 = sand.u32 %s210, 1
        %s1855 = scalar_lea.sflag [#allocation4], %s1854
        %s1856 = sand.u32 %s210, 1
        %s1857 = smul.addr %s1856, 128
        %s1858 = scalar_lea.vmem [#allocation8], %s1857
        // Predicated region
        $region65: #{tpu_custom_call.1} parent=51 // pred_check
          %p1859 = pneg %p220
        $region66: #{tpu_custom_call.1} parent=51 // pred_check_branch
          %1861 = sbr.rel (%p1859) target = $region68
        $region67: #{tpu_custom_call.1} parent=51 // pred_region
          %s1862 = smul.u32 16, %s24
          %s1864 = ssub.s32 2048, 2048
          %1865 = vsyncadd %s1855, %s1864
          %s1866 = smul.addr %s1862, 128
          %s1867 = scalar_lea.hbm %s8, %s1866
          %s1868 = sshll.u32 %s1858, 4
          %s1869 = int_to_ptr.vmem [resolvable:$true] %s1868
          %1874 = dma.vmem_to_hbm [thread:$0]  %s1869, 2048, %s1867, %s1855, 128, 128, 8
        $region68: #{tpu_custom_call.1} parent=51 // pred_fallthru
          _
      $region52: #{tpu_custom_call.1} parent=5 // pred_fallthru
        _
      %p1875 = scmp.le.s32.totalorder 2, %s19
      // Predicated region
      $region69: #{tpu_custom_call.1} parent=5 // pred_check
        %p1876 = pneg %p1875
      $region70: #{tpu_custom_call.1} parent=5 // pred_check_branch
        %1878 = sbr.rel (%p1876) target = $region72
      $region71: #{tpu_custom_call.1} parent=5 // pred_region
        %s1879 = ssub.s32 %s19, 2
        // Predicated region
        $region73: #{tpu_custom_call.1} parent=71 // pred_check
          %p1880 = pneg %p226
        $region74: #{tpu_custom_call.1} parent=71 // pred_check_branch
          %1882 = sbr.rel (%p1880) target = $region76
        $region75: #{tpu_custom_call.1} parent=71 // pred_region
          %s1883 = sand.u32 %s211, 1
          %s1884 = scalar_lea.sflag [#allocation4], %s1883
          %s1885 = sand.u32 %s211, 1
          %s1886 = smul.addr %s1885, 128
          %s1887 = scalar_lea.vmem [#allocation8], %s1886
          %1888 = dma.done %s1884, 2048
        $region76: #{tpu_custom_call.1} parent=71 // pred_fallthru
          _
      $region72: #{tpu_custom_call.1} parent=5 // pred_fallthru
        _
    $region6: #{tpu_custom_call.1} parent=1 // loop_footer
      %s23 = sadd.s32 1, %s19
    $region7: #{tpu_custom_call.1} parent=1 // loop_footer_branch
      %18 = sbr.rel target = $region3
    $region8: #{tpu_custom_call.1} parent=1 // loop_exit
      _
    %1889 = vsyncpa [#allocation3], 1
    %s1890 = scalar_lea.sflag [#allocation3], 1
    %1891 = vsyncpa %s1890, 1
    %1892 = vsyncpa [#allocation6], 1
    %1893 = vsyncpa [#allocation4], 1
    %s1894 = scalar_lea.sflag [#allocation4], 1
    %1895 = vsyncpa %s1894, 1

</llo_original>
